<compile_context>
chip_gen: v6e
topology: v6e:2x2x1
jax: 0.10.0
libtpu: 0.0.40
codegen_flags: <defaults>
</compile_context>

<pallas_src>
import functools

import jax
import jax.numpy as jnp
from jax import lax
from jax.experimental import pallas as pl
from jax.experimental.pallas import tpu as pltpu


def _round_up(n, m):
    return ((n + m - 1) // m) * m


# ---------------------------------------------------------------------------
# Kernel 1: LSTM recurrence, time-chunked.
# grid = (num_batch_blocks, num_time_chunks)   ("parallel", "arbitrary")
# ---------------------------------------------------------------------------
def lstm_chunk_kernel(x_ref, wih_ref, whh_ref, b_ref, h_out_ref,
                      xproj_sc, h_sc, c_sc,
                      *, chunk, batch_blk, hidden, seq_len, padded_len, unroll):
    t_blk = pl.program_id(1)
    n_blk = pl.num_programs(1)
    H = hidden
    Bb = batch_blk

    @pl.when(t_blk == 0)
    def _():
        h_sc[...] = jnp.zeros_like(h_sc)
        c_sc[...] = jnp.zeros_like(c_sc)

    # Chunk input projection: (chunk*Bb, Ep) @ (Ep, 4Hp) in one MXU matmul, combined
    # bias pre-added; stored in compute dtype to halve the largest VMEM consumer.
    # TODO(synk): interleave this matmul with the previous chunk's gate math to hide
    # it in MXU slack instead of running it as a per-chunk prologue.
    x = x_ref[...].reshape(chunk * Bb, -1)
    xproj = jnp.dot(x, wih_ref[...], preferred_element_type=jnp.float32) + b_ref[...]
    xproj_sc[...] = xproj.astype(xproj_sc.dtype)

    w_hh = whh_ref[...]                      # (Hp, 4Hp) resident across the loop
    need_mask = padded_len != seq_len        # static

    def step(t, carry):
        h, c = carry                         # f32 carries
        row = pl.multiple_of(t * Bb, 8)
        g_x = xproj_sc[pl.ds(row, Bb), :].astype(jnp.float32)
        gates = g_x + jnp.dot(h.astype(w_hh.dtype), w_hh,
                              preferred_element_type=jnp.float32)
        # Hp is a multiple of 128, so each gate slice is lane-tile aligned.
        i_g = jax.nn.sigmoid(gates[:, 0 * H:1 * H])
        f_g = jax.nn.sigmoid(gates[:, 1 * H:2 * H])
        g_g = jnp.tanh(gates[:, 2 * H:3 * H])
        o_g = jax.nn.sigmoid(gates[:, 3 * H:4 * H])
        c_new = f_g * c + i_g * g_g
        h_new = o_g * jnp.tanh(c_new)
        if need_mask:
            valid = (t_blk * chunk + t) < seq_len
            h_new = jnp.where(valid, h_new, h)
            c_new = jnp.where(valid, c_new, c)
        return h_new, c_new

    h_new, c_new = lax.fori_loop(0, chunk, step, (h_sc[...], c_sc[...]),
                                 unroll=unroll)
    h_sc[...] = h_new
    c_sc[...] = c_new

    @pl.when(t_blk == n_blk - 1)
    def _():
        h_out_ref[...] = h_new.astype(h_out_ref.dtype)


# ---------------------------------------------------------------------------
# Kernel 2: final projection, tiled over the vocab (lane) dimension.
# ---------------------------------------------------------------------------
def fc_kernel(h_ref, wfc_ref, bfc_ref, out_ref):
    out_ref[...] = (jnp.dot(h_ref[...], wfc_ref[...],
                            preferred_element_type=jnp.float32)
                    + bfc_ref[...]).astype(out_ref.dtype)


# ---------------------------------------------------------------------------
# Wrapper
# ---------------------------------------------------------------------------
def text_generation_forward(x_tokens, params, *, compute_dtype=jnp.bfloat16,
                            time_chunk=None):
    """x_tokens: (B, T) int32 token ids. Returns (B, vocab_size) float32 logits.

    compute_dtype controls MXU operand dtype (bf16 default, MXU-native on all chips);
    accumulation, carries and gate math stay float32.
    """
    emb_table = params["embedding"]          # (V, E)
    w_ih = params["w_ih"]                    # (E, 4H)
    w_hh = params["w_hh"]                    # (H, 4H)
    b = params["b"]                          # (1, 4H)  (= b_ih + b_hh)
    w_fc = params["w_fc"]                    # (H, V)
    b_fc = params["b_fc"]                    # (1, V)

    B, T = x_tokens.shape
    V, E = emb_table.shape
    H = w_hh.shape[0]

    # Pad to TPU-friendly shapes: lanes (last dims) to x128, batch (sublanes) to x8.
    Bp = _round_up(B, 8)
    Ep = _round_up(E, 128)
    Hp = _round_up(H, 128)
    Vp = _round_up(V, 128)
    cd_bytes = jnp.dtype(compute_dtype).itemsize

    def pad_gate_mat(w, rows_p):
        # Pad each of the 4 gate blocks separately so gate slices stay aligned.
        rows = w.shape[0]
        w4 = w.reshape(rows, 4, H)
        w4 = jnp.pad(w4, ((0, rows_p - rows), (0, 0), (0, Hp - H)))
        return w4.reshape(rows_p, 4 * Hp)

    emb_p = jnp.pad(emb_table, ((0, 0), (0, Ep - E)))
    w_ih_p = pad_gate_mat(w_ih, Ep).astype(compute_dtype)
    w_hh_p = pad_gate_mat(w_hh, Hp).astype(compute_dtype)
    b_p = pad_gate_mat(b, 1)                                        # stays f32
    w_fc_p = jnp.pad(w_fc, ((0, Hp - H), (0, Vp - V))).astype(compute_dtype)
    b_fc_p = jnp.pad(b_fc, ((0, 0), (0, Vp - V)))                   # stays f32

    # Batch split across TensorCores (v7x megacore); harmless elsewhere.
    NB = 2 if (Bp % 16 == 0) else 1
    Bb = Bp // NB

    # Time-chunk size: bounds per-chunk VMEM (xproj scratch + x block) independent of T.
    if time_chunk is None:
        chunk = min(T, 64)
        while chunk > 8 and chunk * Bb * (4 * Hp + Ep) * cd_bytes > (8 << 20):
            chunk //= 2
    else:
        chunk = max(1, min(time_chunk, T))
    Tp = _round_up(T, chunk)
    NT = Tp // chunk
    unroll = chunk if chunk <= 8 else 8     # partial unroll for LLO visibility

    # Embedding gather, produced time-major; pad batch and (zero-)pad time to Tp.
    # TODO(synk): fuse the gather into kernel 1 via PrefetchScalarGridSpec row-gather
    # to avoid materializing (T, B, E) in HBM (most valuable on v5e).
    tok_p = jnp.pad(x_tokens, ((0, Bp - B), (0, 0)))                # (Bp, T)
    x_tbe = jnp.take(emb_p, tok_p.T, axis=0)                        # (T, Bp, Ep)
    x_tbe = jnp.pad(x_tbe, ((0, Tp - T), (0, 0), (0, 0))).astype(compute_dtype)

    lstm_kernel = functools.partial(
        lstm_chunk_kernel, chunk=chunk, batch_blk=Bb, hidden=Hp,
        seq_len=T, padded_len=Tp, unroll=unroll)

    # Explicit VMEM budget for kernel 1 (double-buffered inputs + scratch + headroom).
    lstm_vmem = (2 * chunk * Bb * Ep * cd_bytes          # x chunk
                 + 2 * Ep * 4 * Hp * cd_bytes            # w_ih
                 + 2 * Hp * 4 * Hp * cd_bytes            # w_hh
                 + 2 * 4 * Hp * 4                        # bias
                 + 2 * Bb * Hp * cd_bytes                # h_out
                 + chunk * Bb * 4 * Hp * cd_bytes        # xproj scratch
                 + 2 * Bb * Hp * 4 * 2)                  # h/c scratch
    lstm_vmem = int(min(max(lstm_vmem * 5 // 4 + (1 << 20), 8 << 20), 64 << 20))

    h_last = pl.pallas_call(
        lstm_kernel,
        out_shape=jax.ShapeDtypeStruct((Bp, Hp), compute_dtype),
        grid=(NB, NT),
        in_specs=[
            pl.BlockSpec((chunk, Bb, Ep), lambda nb, t: (t, nb, 0)),
            pl.BlockSpec((Ep, 4 * Hp), lambda nb, t: (0, 0)),
            pl.BlockSpec((Hp, 4 * Hp), lambda nb, t: (0, 0)),
            pl.BlockSpec((1, 4 * Hp), lambda nb, t: (0, 0)),
        ],
        out_specs=pl.BlockSpec((Bb, Hp), lambda nb, t: (nb, 0)),
        scratch_shapes=[
            pltpu.VMEM((chunk * Bb, 4 * Hp), compute_dtype),   # xproj chunk
            pltpu.VMEM((Bb, Hp), jnp.float32),                 # h carry
            pltpu.VMEM((Bb, Hp), jnp.float32),                 # c carry
        ],
        compiler_params=pltpu.CompilerParams(
            dimension_semantics=("parallel", "arbitrary"),
            vmem_limit_bytes=lstm_vmem),
    )(x_tbe, w_ih_p, w_hh_p, b_p)

    # ---- Kernel 2: final FC, grid over large vocab tiles (lane-dense stores).
    # TODO(synk): for tiny V (fits VMEM with the recurrence), fuse the FC into kernel 1
    # to save one launch and the h_last HBM round trip.
    TV = 128
    for cand in (2048, 1024, 512, 256, 128):
        if Vp % cand == 0 and 2 * Hp * cand * cd_bytes <= (16 << 20):
            TV = cand
            break
    fc_vmem = (2 * Bp * Hp * cd_bytes + 2 * Hp * TV * cd_bytes
               + 2 * TV * 4 + 2 * Bp * TV * 4)
    fc_vmem = int(min(max(fc_vmem * 5 // 4 + (1 << 20), 8 << 20), 64 << 20))

    logits_p = pl.pallas_call(
        fc_kernel,
        out_shape=jax.ShapeDtypeStruct((Bp, Vp), jnp.float32),
        grid=(Vp // TV,),
        in_specs=[
            pl.BlockSpec((Bp, Hp), lambda j: (0, 0)),
            pl.BlockSpec((Hp, TV), lambda j: (0, j)),
            pl.BlockSpec((1, TV), lambda j: (0, j)),
        ],
        out_specs=pl.BlockSpec((Bp, TV), lambda j: (0, j)),
        compiler_params=pltpu.CompilerParams(
            dimension_semantics=("parallel",),
            vmem_limit_bytes=fc_vmem),
    )(h_last, w_fc_p, b_fc_p)

    return logits_p[:B, :V]


# ---------------------------------------------------------------------------
# Pure-JAX reference (PyTorch semantics) and param init
# ---------------------------------------------------------------------------
def reference_forward(x_tokens, params):
    emb = jnp.take(params["embedding"], x_tokens, axis=0)      # (B, T, E)
    B, T, E = emb.shape
    H = params["w_hh"].shape[0]

    def cell(carry, x_t):
        h, c = carry
        gates = x_t @ params["w_ih"] + h @ params["w_hh"] + params["b"][0]
        i_g = jax.nn.sigmoid(gates[:, 0 * H:1 * H])
        f_g = jax.nn.sigmoid(gates[:, 1 * H:2 * H])
        g_g = jnp.tanh(gates[:, 2 * H:3 * H])
        o_g = jax.nn.sigmoid(gates[:, 3 * H:4 * H])
        c_new = f_g * c + i_g * g_g
        h_new = o_g * jnp.tanh(c_new)
        return (h_new, c_new), h_new

    h0 = jnp.zeros((B, H), jnp.float32)
    c0 = jnp.zeros((B, H), jnp.float32)
    (h_last, _), _ = lax.scan(cell, (h0, c0), jnp.transpose(emb, (1, 0, 2)))
    return h_last @ params["w_fc"] + params["b_fc"][0]


def init_params(key, vocab_size, embedding_dim, hidden_dim):
    ks = jax.random.split(key, 7)
    scale = 0.1
    return {
        "embedding": scale * jax.random.normal(ks[0], (vocab_size, embedding_dim), jnp.float32),
        # PyTorch stores weight_ih_l0: (4H, E), weight_hh_l0: (4H, H); we keep transposes.
        "w_ih": scale * jax.random.normal(ks[1], (embedding_dim, 4 * hidden_dim), jnp.float32),
        "w_hh": scale * jax.random.normal(ks[2], (hidden_dim, 4 * hidden_dim), jnp.float32),
        "b": (scale * jax.random.normal(ks[3], (1, 4 * hidden_dim), jnp.float32)
              + scale * jax.random.normal(ks[4], (1, 4 * hidden_dim), jnp.float32)),
        "w_fc": scale * jax.random.normal(ks[5], (hidden_dim, vocab_size), jnp.float32),
        "b_fc": scale * jax.random.normal(ks[6], (1, vocab_size), jnp.float32),
    }


if __name__ == "__main__":
    vocab_size = 64
    embedding_dim = 16
    hidden_dim = 32
    batch = 2
    seq_len = 8

    key = jax.random.PRNGKey(0)
    pkey, xkey = jax.random.split(key)
    params = init_params(pkey, vocab_size, embedding_dim, hidden_dim)
    x = jax.random.randint(xkey, (batch, seq_len), 0, vocab_size, dtype=jnp.int32)

    ref = jax.block_until_ready(reference_forward(x, params))

    # f32 MXU operands: exact match vs reference.
    fwd_f32 = jax.jit(functools.partial(text_generation_forward,
                                        compute_dtype=jnp.float32))
    out = jax.block_until_ready(fwd_f32(x, params))
    assert out.shape == (batch, vocab_size)
    assert jnp.allclose(out, ref, atol=1e-5, rtol=1e-5), "f32 mismatch vs reference"

    # bf16 MXU operands (default), f32 accumulation + carries + gate math.
    fwd_bf16 = jax.jit(text_generation_forward)
    out_bf16 = jax.block_until_ready(fwd_bf16(x, params))
    assert out_bf16.shape == (batch, vocab_size)
    assert jnp.allclose(out_bf16, ref, atol=3e-2), "bf16 output diverged from reference"

    # Exercise the time-chunked (Tp > T, masked tail) and batch-split (NB=2) paths.
    x2 = jax.random.randint(jax.random.PRNGKey(1), (16, 10), 0, vocab_size,
                            dtype=jnp.int32)
    ref2 = jax.block_until_ready(reference_forward(x2, params))
    fwd_chunk = jax.jit(functools.partial(text_generation_forward,
                                          compute_dtype=jnp.float32, time_chunk=4))
    out2 = jax.block_until_ready(fwd_chunk(x2, params))
    assert out2.shape == (16, vocab_size)
    assert jnp.allclose(out2, ref2, atol=1e-5, rtol=1e-5), "chunked path mismatch"

    print("KERNEL_OK")
</pallas_src>

<mosaic_0001>
module attributes {stable_mosaic.version = 11 : i64} {
  func.func @fc_kernel(%arg0: i32, %arg1: memref<8x128xf32, #tpu.memory_space<vmem>>, %arg2: memref<128x128xf32, #tpu.memory_space<vmem>>, %arg3: memref<1x128xf32, #tpu.memory_space<vmem>>, %arg4: memref<8x128xf32, #tpu.memory_space<vmem>>) attributes {dimension_semantics = [#tpu.dimension_semantics<parallel>], iteration_bounds = array<i64: 1>, scalar_prefetch = 0 : i64, scratch_operands = 0 : i64, tpu.core_type = #tpu.core_type<tc>, window_params = [{pipeline_mode = #tpu.pipeline_mode<synchronous>, transform_indices = @transform_0, window_bounds = array<i64: 8, 128>}, {transform_indices = @transform_1, window_bounds = array<i64: 128, 128>}, {transform_indices = @transform_2, window_bounds = array<i64: 1, 128>}, {transform_indices = @transform_3, window_bounds = array<i64: 8, 128>}]} {
    %c0 = arith.constant 0 : index
    %c0_0 = arith.constant 0 : index
    %0 = vector.load %arg1[%c0, %c0_0] : memref<8x128xf32, #tpu.memory_space<vmem>>, vector<8x128xf32>
    %c0_1 = arith.constant 0 : index
    %c0_2 = arith.constant 0 : index
    %1 = vector.load %arg2[%c0_1, %c0_2] : memref<128x128xf32, #tpu.memory_space<vmem>>, vector<128x128xf32>
    %cst = arith.constant dense<0.000000e+00> : vector<8x128xf32>
    %2 = tpu.matmul %0, %1, %cst {dimension_numbers = #tpu.dot_dimension_numbers<[1], [0], [0], [1], [0, 0, 1, 1], [], []>} : vector<8x128xf32>, vector<128x128xf32>, vector<8x128xf32> -> vector<8x128xf32>
    %c0_3 = arith.constant 0 : index
    %c0_4 = arith.constant 0 : index
    %3 = vector.load %arg3[%c0_3, %c0_4] : memref<1x128xf32, #tpu.memory_space<vmem>>, vector<1x128xf32>
    %4 = vector.broadcast %3 : vector<1x128xf32> to vector<8x128xf32>
    %5 = arith.addf %2, %4 : vector<8x128xf32>
    %c0_5 = arith.constant 0 : index
    %c0_6 = arith.constant 0 : index
    %6 = vector.load %arg4[%c0_5, %c0_6] : memref<8x128xf32, #tpu.memory_space<vmem>>, vector<8x128xf32>
    tpu.vector_store %arg4[%c0_5, %c0_6], %5 {strides = array<i32>} : memref<8x128xf32, #tpu.memory_space<vmem>>, vector<8x128xf32>,
    return
  }
  func.func @transform_0(%arg0: i32) -> (i32, i32) {
    %c0_i32 = arith.constant 0 : i32
    %c0_i32_0 = arith.constant 0 : i32
    %c0_i32_1 = arith.constant 0 : i32
    return %c0_i32, %c0_i32_0 : i32, i32
  }
  func.func @transform_1(%arg0: i32) -> (i32, i32) {
    %c0_i32 = arith.constant 0 : i32
    %c0_i32_0 = arith.constant 0 : i32
    return %c0_i32, %arg0 : i32, i32
  }
  func.func @transform_2(%arg0: i32) -> (i32, i32) {
    %c0_i32 = arith.constant 0 : i32
    %c0_i32_0 = arith.constant 0 : i32
    return %c0_i32, %arg0 : i32, i32
  }
  func.func @transform_3(%arg0: i32) -> (i32, i32) {
    %c0_i32 = arith.constant 0 : i32
    %c0_i32_0 = arith.constant 0 : i32
    return %c0_i32, %arg0 : i32, i32
  }
}

module attributes {stable_mosaic.version = 11 : i64} {
  func.func @lstm_chunk_kernel(%arg0: i32, %arg1: i32, %arg2: memref<8x8x128xf32, #tpu.memory_space<vmem>>, %arg3: memref<128x512xf32, #tpu.memory_space<vmem>>, %arg4: memref<128x512xf32, #tpu.memory_space<vmem>>, %arg5: memref<1x512xf32, #tpu.memory_space<vmem>>, %arg6: memref<8x128xf32, #tpu.memory_space<vmem>>, %arg7: memref<64x512xf32, #tpu.memory_space<vmem>>, %arg8: memref<8x128xf32, #tpu.memory_space<vmem>>, %arg9: memref<8x128xf32, #tpu.memory_space<vmem>>) attributes {dimension_semantics = [#tpu.dimension_semantics<parallel>, #tpu.dimension_semantics<arbitrary>], iteration_bounds = array<i64: 1, 1>, scalar_prefetch = 0 : i64, scratch_operands = 3 : i64, tpu.core_type = #tpu.core_type<tc>, window_params = [{transform_indices = @transform_0, window_bounds = array<i64: 8, 8, 128>}, {pipeline_mode = #tpu.pipeline_mode<synchronous>, transform_indices = @transform_1, window_bounds = array<i64: 128, 512>}, {pipeline_mode = #tpu.pipeline_mode<synchronous>, transform_indices = @transform_2, window_bounds = array<i64: 128, 512>}, {pipeline_mode = #tpu.pipeline_mode<synchronous>, transform_indices = @transform_3, window_bounds = array<i64: 1, 512>}, {transform_indices = @transform_4, window_bounds = array<i64: 8, 128>}]} {
    %c0_i32 = arith.constant 0 : i32
    %0 = arith.cmpi eq, %arg1, %c0_i32 : i32
    %1 = arith.extui %0 : i1 to i32
    %c0_i32_0 = arith.constant 0 : i32
    %2 = arith.cmpi ne, %1, %c0_i32_0 : i32
    scf.if %2 {
      %cst_70 = arith.constant 0.000000e+00 : f32
      %267 = vector.broadcast %cst_70 : f32 to vector<8x128xf32>
      %c0_71 = arith.constant 0 : index
      %c0_72 = arith.constant 0 : index
      %268 = vector.load %arg8[%c0_71, %c0_72] : memref<8x128xf32, #tpu.memory_space<vmem>>, vector<8x128xf32>
      tpu.vector_store %arg8[%c0_71, %c0_72], %267 {strides = array<i32>} : memref<8x128xf32, #tpu.memory_space<vmem>>, vector<8x128xf32>,
      %cst_73 = arith.constant 0.000000e+00 : f32
      %269 = vector.broadcast %cst_73 : f32 to vector<8x128xf32>
      %c0_74 = arith.constant 0 : index
      %c0_75 = arith.constant 0 : index
      %270 = vector.load %arg9[%c0_74, %c0_75] : memref<8x128xf32, #tpu.memory_space<vmem>>, vector<8x128xf32>
      tpu.vector_store %arg9[%c0_74, %c0_75], %269 {strides = array<i32>} : memref<8x128xf32, #tpu.memory_space<vmem>>, vector<8x128xf32>,
    } else {
    }
    %c0 = arith.constant 0 : index
    %c0_1 = arith.constant 0 : index
    %c0_2 = arith.constant 0 : index
    %3 = vector.load %arg2[%c0, %c0_1, %c0_2] : memref<8x8x128xf32, #tpu.memory_space<vmem>>, vector<8x8x128xf32>
    %4 = vector.shape_cast %3 : vector<8x8x128xf32> to vector<64x128xf32>
    %c0_3 = arith.constant 0 : index
    %c0_4 = arith.constant 0 : index
    %5 = vector.load %arg3[%c0_3, %c0_4] : memref<128x512xf32, #tpu.memory_space<vmem>>, vector<128x512xf32>
    %cst = arith.constant dense<0.000000e+00> : vector<64x512xf32>
    %6 = tpu.matmul %4, %5, %cst {dimension_numbers = #tpu.dot_dimension_numbers<[1], [0], [0], [1], [0, 0, 1, 1], [], []>} : vector<64x128xf32>, vector<128x512xf32>, vector<64x512xf32> -> vector<64x512xf32>
    %c0_5 = arith.constant 0 : index
    %c0_6 = arith.constant 0 : index
    %7 = vector.load %arg5[%c0_5, %c0_6] : memref<1x512xf32, #tpu.memory_space<vmem>>, vector<1x512xf32>
    %8 = vector.broadcast %7 : vector<1x512xf32> to vector<64x512xf32>
    %9 = arith.addf %6, %8 : vector<64x512xf32>
    %c0_7 = arith.constant 0 : index
    %c0_8 = arith.constant 0 : index
    %10 = vector.load %arg7[%c0_7, %c0_8] : memref<64x512xf32, #tpu.memory_space<vmem>>, vector<64x512xf32>
    tpu.vector_store %arg7[%c0_7, %c0_8], %9 {strides = array<i32>} : memref<64x512xf32, #tpu.memory_space<vmem>>, vector<64x512xf32>,
    %c0_9 = arith.constant 0 : index
    %c0_10 = arith.constant 0 : index
    %11 = vector.load %arg4[%c0_9, %c0_10] : memref<128x512xf32, #tpu.memory_space<vmem>>, vector<128x512xf32>
    %c0_11 = arith.constant 0 : index
    %c0_12 = arith.constant 0 : index
    %12 = vector.load %arg8[%c0_11, %c0_12] : memref<8x128xf32, #tpu.memory_space<vmem>>, vector<8x128xf32>
    %c0_13 = arith.constant 0 : index
    %c0_14 = arith.constant 0 : index
    %13 = vector.load %arg9[%c0_13, %c0_14] : memref<8x128xf32, #tpu.memory_space<vmem>>, vector<8x128xf32>
    %c0_i32_15 = arith.constant 0 : i32
    %c8_i32 = arith.constant 8 : i32
    %14 = arith.muli %c0_i32_15, %c8_i32 : i32
    %15 = tpu.assume_multiple %14, 8 : i32
    %16 = arith.index_cast %15 : i32 to index
    %c0_16 = arith.constant 0 : index
    %17 = vector.load %arg7[%16, %c0_16] : memref<64x512xf32, #tpu.memory_space<vmem>>, vector<8x512xf32>
    %cst_17 = arith.constant dense<0.000000e+00> : vector<8x512xf32>
    %18 = tpu.matmul %12, %11, %cst_17 {dimension_numbers = #tpu.dot_dimension_numbers<[1], [0], [0], [1], [0, 0, 1, 1], [], []>} : vector<8x128xf32>, vector<128x512xf32>, vector<8x512xf32> -> vector<8x512xf32>
    %19 = arith.addf %17, %18 : vector<8x512xf32>
    %20 = vector.extract_strided_slice %19 {offsets = [0, 0], sizes = [8, 128], strides = [1, 1]} : vector<8x512xf32> to vector<8x128xf32>
    %21 = arith.negf %20 : vector<8x128xf32>
    %22 = math.exp %21 : vector<8x128xf32>
    %cst_18 = arith.constant 1.000000e+00 : f32
    %23 = vector.broadcast %cst_18 : f32 to vector<8x128xf32>
    %24 = arith.addf %23, %22 : vector<8x128xf32>
    %25 = arith.divf %23, %24 : vector<8x128xf32>
    %26 = vector.extract_strided_slice %19 {offsets = [0, 128], sizes = [8, 128], strides = [1, 1]} : vector<8x512xf32> to vector<8x128xf32>
    %27 = arith.negf %26 : vector<8x128xf32>
    %28 = math.exp %27 : vector<8x128xf32>
    %cst_19 = arith.constant 1.000000e+00 : f32
    %29 = vector.broadcast %cst_19 : f32 to vector<8x128xf32>
    %30 = arith.addf %29, %28 : vector<8x128xf32>
    %31 = arith.divf %29, %30 : vector<8x128xf32>
    %32 = vector.extract_strided_slice %19 {offsets = [0, 256], sizes = [8, 128], strides = [1, 1]} : vector<8x512xf32> to vector<8x128xf32>
    %33 = math.tanh %32 : vector<8x128xf32>
    %34 = vector.extract_strided_slice %19 {offsets = [0, 384], sizes = [8, 128], strides = [1, 1]} : vector<8x512xf32> to vector<8x128xf32>
    %35 = arith.negf %34 : vector<8x128xf32>
    %36 = math.exp %35 : vector<8x128xf32>
    %cst_20 = arith.constant 1.000000e+00 : f32
    %37 = vector.broadcast %cst_20 : f32 to vector<8x128xf32>
    %38 = arith.addf %37, %36 : vector<8x128xf32>
    %39 = arith.divf %37, %38 : vector<8x128xf32>
    %40 = arith.mulf %31, %13 : vector<8x128xf32>
    %41 = arith.mulf %25, %33 : vector<8x128xf32>
    %42 = arith.addf %40, %41 : vector<8x128xf32>
    %43 = math.tanh %42 : vector<8x128xf32>
    %44 = arith.mulf %39, %43 : vector<8x128xf32>
    %c1_i32 = arith.constant 1 : i32
    %c8_i32_21 = arith.constant 8 : i32
    %45 = arith.muli %c1_i32, %c8_i32_21 : i32
    %46 = tpu.assume_multiple %45, 8 : i32
    %47 = arith.index_cast %46 : i32 to index
    %c0_22 = arith.constant 0 : index
    %48 = vector.load %arg7[%47, %c0_22] : memref<64x512xf32, #tpu.memory_space<vmem>>, vector<8x512xf32>
    %cst_23 = arith.constant dense<0.000000e+00> : vector<8x512xf32>
    %49 = tpu.matmul %44, %11, %cst_23 {dimension_numbers = #tpu.dot_dimension_numbers<[1], [0], [0], [1], [0, 0, 1, 1], [], []>} : vector<8x128xf32>, vector<128x512xf32>, vector<8x512xf32> -> vector<8x512xf32>
    %50 = arith.addf %48, %49 : vector<8x512xf32>
    %51 = vector.extract_strided_slice %50 {offsets = [0, 0], sizes = [8, 128], strides = [1, 1]} : vector<8x512xf32> to vector<8x128xf32>
    %52 = arith.negf %51 : vector<8x128xf32>
    %53 = math.exp %52 : vector<8x128xf32>
    %cst_24 = arith.constant 1.000000e+00 : f32
    %54 = vector.broadcast %cst_24 : f32 to vector<8x128xf32>
    %55 = arith.addf %54, %53 : vector<8x128xf32>
    %56 = arith.divf %54, %55 : vector<8x128xf32>
    %57 = vector.extract_strided_slice %50 {offsets = [0, 128], sizes = [8, 128], strides = [1, 1]} : vector<8x512xf32> to vector<8x128xf32>
    %58 = arith.negf %57 : vector<8x128xf32>
    %59 = math.exp %58 : vector<8x128xf32>
    %cst_25 = arith.constant 1.000000e+00 : f32
    %60 = vector.broadcast %cst_25 : f32 to vector<8x128xf32>
    %61 = arith.addf %60, %59 : vector<8x128xf32>
    %62 = arith.divf %60, %61 : vector<8x128xf32>
    %63 = vector.extract_strided_slice %50 {offsets = [0, 256], sizes = [8, 128], strides = [1, 1]} : vector<8x512xf32> to vector<8x128xf32>
    %64 = math.tanh %63 : vector<8x128xf32>
    %65 = vector.extract_strided_slice %50 {offsets = [0, 384], sizes = [8, 128], strides = [1, 1]} : vector<8x512xf32> to vector<8x128xf32>
    %66 = arith.negf %65 : vector<8x128xf32>
    %67 = math.exp %66 : vector<8x128xf32>
    %cst_26 = arith.constant 1.000000e+00 : f32
    %68 = vector.broadcast %cst_26 : f32 to vector<8x128xf32>
    %69 = arith.addf %68, %67 : vector<8x128xf32>
    %70 = arith.divf %68, %69 : vector<8x128xf32>
    %71 = arith.mulf %62, %42 : vector<8x128xf32>
    %72 = arith.mulf %56, %64 : vector<8x128xf32>
    %73 = arith.addf %71, %72 : vector<8x128xf32>
    %74 = math.tanh %73 : vector<8x128xf32>
    %75 = arith.mulf %70, %74 : vector<8x128xf32>
    %c2_i32 = arith.constant 2 : i32
    %c8_i32_27 = arith.constant 8 : i32
    %76 = arith.muli %c2_i32, %c8_i32_27 : i32
    %77 = tpu.assume_multiple %76, 8 : i32
    %78 = arith.index_cast %77 : i32 to index
    %c0_28 = arith.constant 0 : index
    %79 = vector.load %arg7[%78, %c0_28] : memref<64x512xf32, #tpu.memory_space<vmem>>, vector<8x512xf32>
    %cst_29 = arith.constant dense<0.000000e+00> : vector<8x512xf32>
    %80 = tpu.matmul %75, %11, %cst_29 {dimension_numbers = #tpu.dot_dimension_numbers<[1], [0], [0], [1], [0, 0, 1, 1], [], []>} : vector<8x128xf32>, vector<128x512xf32>, vector<8x512xf32> -> vector<8x512xf32>
    %81 = arith.addf %79, %80 : vector<8x512xf32>
    %82 = vector.extract_strided_slice %81 {offsets = [0, 0], sizes = [8, 128], strides = [1, 1]} : vector<8x512xf32> to vector<8x128xf32>
    %83 = arith.negf %82 : vector<8x128xf32>
    %84 = math.exp %83 : vector<8x128xf32>
    %cst_30 = arith.constant 1.000000e+00 : f32
    %85 = vector.broadcast %cst_30 : f32 to vector<8x128xf32>
    %86 = arith.addf %85, %84 : vector<8x128xf32>
    %87 = arith.divf %85, %86 : vector<8x128xf32>
    %88 = vector.extract_strided_slice %81 {offsets = [0, 128], sizes = [8, 128], strides = [1, 1]} : vector<8x512xf32> to vector<8x128xf32>
    %89 = arith.negf %88 : vector<8x128xf32>
    %90 = math.exp %89 : vector<8x128xf32>
    %cst_31 = arith.constant 1.000000e+00 : f32
    %91 = vector.broadcast %cst_31 : f32 to vector<8x128xf32>
    %92 = arith.addf %91, %90 : vector<8x128xf32>
    %93 = arith.divf %91, %92 : vector<8x128xf32>
    %94 = vector.extract_strided_slice %81 {offsets = [0, 256], sizes = [8, 128], strides = [1, 1]} : vector<8x512xf32> to vector<8x128xf32>
    %95 = math.tanh %94 : vector<8x128xf32>
    %96 = vector.extract_strided_slice %81 {offsets = [0, 384], sizes = [8, 128], strides = [1, 1]} : vector<8x512xf32> to vector<8x128xf32>
    %97 = arith.negf %96 : vector<8x128xf32>
    %98 = math.exp %97 : vector<8x128xf32>
    %cst_32 = arith.constant 1.000000e+00 : f32
    %99 = vector.broadcast %cst_32 : f32 to vector<8x128xf32>
    %100 = arith.addf %99, %98 : vector<8x128xf32>
    %101 = arith.divf %99, %100 : vector<8x128xf32>
    %102 = arith.mulf %93, %73 : vector<8x128xf32>
    %103 = arith.mulf %87, %95 : vector<8x128xf32>
    %104 = arith.addf %102, %103 : vector<8x128xf32>
    %105 = math.tanh %104 : vector<8x128xf32>
    %106 = arith.mulf %101, %105 : vector<8x128xf32>
    %c3_i32 = arith.constant 3 : i32
    %c8_i32_33 = arith.constant 8 : i32
    %107 = arith.muli %c3_i32, %c8_i32_33 : i32
    %108 = tpu.assume_multiple %107, 8 : i32
    %109 = arith.index_cast %108 : i32 to index
    %c0_34 = arith.constant 0 : index
    %110 = vector.load %arg7[%109, %c0_34] : memref<64x512xf32, #tpu.memory_space<vmem>>, vector<8x512xf32>
    %cst_35 = arith.constant dense<0.000000e+00> : vector<8x512xf32>
    %111 = tpu.matmul %106, %11, %cst_35 {dimension_numbers = #tpu.dot_dimension_numbers<[1], [0], [0], [1], [0, 0, 1, 1], [], []>} : vector<8x128xf32>, vector<128x512xf32>, vector<8x512xf32> -> vector<8x512xf32>
    %112 = arith.addf %110, %111 : vector<8x512xf32>
    %113 = vector.extract_strided_slice %112 {offsets = [0, 0], sizes = [8, 128], strides = [1, 1]} : vector<8x512xf32> to vector<8x128xf32>
    %114 = arith.negf %113 : vector<8x128xf32>
    %115 = math.exp %114 : vector<8x128xf32>
    %cst_36 = arith.constant 1.000000e+00 : f32
    %116 = vector.broadcast %cst_36 : f32 to vector<8x128xf32>
    %117 = arith.addf %116, %115 : vector<8x128xf32>
    %118 = arith.divf %116, %117 : vector<8x128xf32>
    %119 = vector.extract_strided_slice %112 {offsets = [0, 128], sizes = [8, 128], strides = [1, 1]} : vector<8x512xf32> to vector<8x128xf32>
    %120 = arith.negf %119 : vector<8x128xf32>
    %121 = math.exp %120 : vector<8x128xf32>
    %cst_37 = arith.constant 1.000000e+00 : f32
    %122 = vector.broadcast %cst_37 : f32 to vector<8x128xf32>
    %123 = arith.addf %122, %121 : vector<8x128xf32>
    %124 = arith.divf %122, %123 : vector<8x128xf32>
    %125 = vector.extract_strided_slice %112 {offsets = [0, 256], sizes = [8, 128], strides = [1, 1]} : vector<8x512xf32> to vector<8x128xf32>
    %126 = math.tanh %125 : vector<8x128xf32>
    %127 = vector.extract_strided_slice %112 {offsets = [0, 384], sizes = [8, 128], strides = [1, 1]} : vector<8x512xf32> to vector<8x128xf32>
    %128 = arith.negf %127 : vector<8x128xf32>
    %129 = math.exp %128 : vector<8x128xf32>
    %cst_38 = arith.constant 1.000000e+00 : f32
    %130 = vector.broadcast %cst_38 : f32 to vector<8x128xf32>
    %131 = arith.addf %130, %129 : vector<8x128xf32>
    %132 = arith.divf %130, %131 : vector<8x128xf32>
    %133 = arith.mulf %124, %104 : vector<8x128xf32>
    %134 = arith.mulf %118, %126 : vector<8x128xf32>
    %135 = arith.addf %133, %134 : vector<8x128xf32>
    %136 = math.tanh %135 : vector<8x128xf32>
    %137 = arith.mulf %132, %136 : vector<8x128xf32>
    %c4_i32 = arith.constant 4 : i32
    %c8_i32_39 = arith.constant 8 : i32
    %138 = arith.muli %c4_i32, %c8_i32_39 : i32
    %139 = tpu.assume_multiple %138, 8 : i32
    %140 = arith.index_cast %139 : i32 to index
    %c0_40 = arith.constant 0 : index
    %141 = vector.load %arg7[%140, %c0_40] : memref<64x512xf32, #tpu.memory_space<vmem>>, vector<8x512xf32>
    %cst_41 = arith.constant dense<0.000000e+00> : vector<8x512xf32>
    %142 = tpu.matmul %137, %11, %cst_41 {dimension_numbers = #tpu.dot_dimension_numbers<[1], [0], [0], [1], [0, 0, 1, 1], [], []>} : vector<8x128xf32>, vector<128x512xf32>, vector<8x512xf32> -> vector<8x512xf32>
    %143 = arith.addf %141, %142 : vector<8x512xf32>
    %144 = vector.extract_strided_slice %143 {offsets = [0, 0], sizes = [8, 128], strides = [1, 1]} : vector<8x512xf32> to vector<8x128xf32>
    %145 = arith.negf %144 : vector<8x128xf32>
    %146 = math.exp %145 : vector<8x128xf32>
    %cst_42 = arith.constant 1.000000e+00 : f32
    %147 = vector.broadcast %cst_42 : f32 to vector<8x128xf32>
    %148 = arith.addf %147, %146 : vector<8x128xf32>
    %149 = arith.divf %147, %148 : vector<8x128xf32>
    %150 = vector.extract_strided_slice %143 {offsets = [0, 128], sizes = [8, 128], strides = [1, 1]} : vector<8x512xf32> to vector<8x128xf32>
    %151 = arith.negf %150 : vector<8x128xf32>
    %152 = math.exp %151 : vector<8x128xf32>
    %cst_43 = arith.constant 1.000000e+00 : f32
    %153 = vector.broadcast %cst_43 : f32 to vector<8x128xf32>
    %154 = arith.addf %153, %152 : vector<8x128xf32>
    %155 = arith.divf %153, %154 : vector<8x128xf32>
    %156 = vector.extract_strided_slice %143 {offsets = [0, 256], sizes = [8, 128], strides = [1, 1]} : vector<8x512xf32> to vector<8x128xf32>
    %157 = math.tanh %156 : vector<8x128xf32>
    %158 = vector.extract_strided_slice %143 {offsets = [0, 384], sizes = [8, 128], strides = [1, 1]} : vector<8x512xf32> to vector<8x128xf32>
    %159 = arith.negf %158 : vector<8x128xf32>
    %160 = math.exp %159 : vector<8x128xf32>
    %cst_44 = arith.constant 1.000000e+00 : f32
    %161 = vector.broadcast %cst_44 : f32 to vector<8x128xf32>
    %162 = arith.addf %161, %160 : vector<8x128xf32>
    %163 = arith.divf %161, %162 : vector<8x128xf32>
    %164 = arith.mulf %155, %135 : vector<8x128xf32>
    %165 = arith.mulf %149, %157 : vector<8x128xf32>
    %166 = arith.addf %164, %165 : vector<8x128xf32>
    %167 = math.tanh %166 : vector<8x128xf32>
    %168 = arith.mulf %163, %167 : vector<8x128xf32>
    %c5_i32 = arith.constant 5 : i32
    %c8_i32_45 = arith.constant 8 : i32
    %169 = arith.muli %c5_i32, %c8_i32_45 : i32
    %170 = tpu.assume_multiple %169, 8 : i32
    %171 = arith.index_cast %170 : i32 to index
    %c0_46 = arith.constant 0 : index
    %172 = vector.load %arg7[%171, %c0_46] : memref<64x512xf32, #tpu.memory_space<vmem>>, vector<8x512xf32>
    %cst_47 = arith.constant dense<0.000000e+00> : vector<8x512xf32>
    %173 = tpu.matmul %168, %11, %cst_47 {dimension_numbers = #tpu.dot_dimension_numbers<[1], [0], [0], [1], [0, 0, 1, 1], [], []>} : vector<8x128xf32>, vector<128x512xf32>, vector<8x512xf32> -> vector<8x512xf32>
    %174 = arith.addf %172, %173 : vector<8x512xf32>
    %175 = vector.extract_strided_slice %174 {offsets = [0, 0], sizes = [8, 128], strides = [1, 1]} : vector<8x512xf32> to vector<8x128xf32>
    %176 = arith.negf %175 : vector<8x128xf32>
    %177 = math.exp %176 : vector<8x128xf32>
    %cst_48 = arith.constant 1.000000e+00 : f32
    %178 = vector.broadcast %cst_48 : f32 to vector<8x128xf32>
    %179 = arith.addf %178, %177 : vector<8x128xf32>
    %180 = arith.divf %178, %179 : vector<8x128xf32>
    %181 = vector.extract_strided_slice %174 {offsets = [0, 128], sizes = [8, 128], strides = [1, 1]} : vector<8x512xf32> to vector<8x128xf32>
    %182 = arith.negf %181 : vector<8x128xf32>
    %183 = math.exp %182 : vector<8x128xf32>
    %cst_49 = arith.constant 1.000000e+00 : f32
    %184 = vector.broadcast %cst_49 : f32 to vector<8x128xf32>
    %185 = arith.addf %184, %183 : vector<8x128xf32>
    %186 = arith.divf %184, %185 : vector<8x128xf32>
    %187 = vector.extract_strided_slice %174 {offsets = [0, 256], sizes = [8, 128], strides = [1, 1]} : vector<8x512xf32> to vector<8x128xf32>
    %188 = math.tanh %187 : vector<8x128xf32>
    %189 = vector.extract_strided_slice %174 {offsets = [0, 384], sizes = [8, 128], strides = [1, 1]} : vector<8x512xf32> to vector<8x128xf32>
    %190 = arith.negf %189 : vector<8x128xf32>
    %191 = math.exp %190 : vector<8x128xf32>
    %cst_50 = arith.constant 1.000000e+00 : f32
    %192 = vector.broadcast %cst_50 : f32 to vector<8x128xf32>
    %193 = arith.addf %192, %191 : vector<8x128xf32>
    %194 = arith.divf %192, %193 : vector<8x128xf32>
    %195 = arith.mulf %186, %166 : vector<8x128xf32>
    %196 = arith.mulf %180, %188 : vector<8x128xf32>
    %197 = arith.addf %195, %196 : vector<8x128xf32>
    %198 = math.tanh %197 : vector<8x128xf32>
    %199 = arith.mulf %194, %198 : vector<8x128xf32>
    %c6_i32 = arith.constant 6 : i32
    %c8_i32_51 = arith.constant 8 : i32
    %200 = arith.muli %c6_i32, %c8_i32_51 : i32
    %201 = tpu.assume_multiple %200, 8 : i32
    %202 = arith.index_cast %201 : i32 to index
    %c0_52 = arith.constant 0 : index
    %203 = vector.load %arg7[%202, %c0_52] : memref<64x512xf32, #tpu.memory_space<vmem>>, vector<8x512xf32>
    %cst_53 = arith.constant dense<0.000000e+00> : vector<8x512xf32>
    %204 = tpu.matmul %199, %11, %cst_53 {dimension_numbers = #tpu.dot_dimension_numbers<[1], [0], [0], [1], [0, 0, 1, 1], [], []>} : vector<8x128xf32>, vector<128x512xf32>, vector<8x512xf32> -> vector<8x512xf32>
    %205 = arith.addf %203, %204 : vector<8x512xf32>
    %206 = vector.extract_strided_slice %205 {offsets = [0, 0], sizes = [8, 128], strides = [1, 1]} : vector<8x512xf32> to vector<8x128xf32>
    %207 = arith.negf %206 : vector<8x128xf32>
    %208 = math.exp %207 : vector<8x128xf32>
    %cst_54 = arith.constant 1.000000e+00 : f32
    %209 = vector.broadcast %cst_54 : f32 to vector<8x128xf32>
    %210 = arith.addf %209, %208 : vector<8x128xf32>
    %211 = arith.divf %209, %210 : vector<8x128xf32>
    %212 = vector.extract_strided_slice %205 {offsets = [0, 128], sizes = [8, 128], strides = [1, 1]} : vector<8x512xf32> to vector<8x128xf32>
    %213 = arith.negf %212 : vector<8x128xf32>
    %214 = math.exp %213 : vector<8x128xf32>
    %cst_55 = arith.constant 1.000000e+00 : f32
    %215 = vector.broadcast %cst_55 : f32 to vector<8x128xf32>
    %216 = arith.addf %215, %214 : vector<8x128xf32>
    %217 = arith.divf %215, %216 : vector<8x128xf32>
    %218 = vector.extract_strided_slice %205 {offsets = [0, 256], sizes = [8, 128], strides = [1, 1]} : vector<8x512xf32> to vector<8x128xf32>
    %219 = math.tanh %218 : vector<8x128xf32>
    %220 = vector.extract_strided_slice %205 {offsets = [0, 384], sizes = [8, 128], strides = [1, 1]} : vector<8x512xf32> to vector<8x128xf32>
    %221 = arith.negf %220 : vector<8x128xf32>
    %222 = math.exp %221 : vector<8x128xf32>
    %cst_56 = arith.constant 1.000000e+00 : f32
    %223 = vector.broadcast %cst_56 : f32 to vector<8x128xf32>
    %224 = arith.addf %223, %222 : vector<8x128xf32>
    %225 = arith.divf %223, %224 : vector<8x128xf32>
    %226 = arith.mulf %217, %197 : vector<8x128xf32>
    %227 = arith.mulf %211, %219 : vector<8x128xf32>
    %228 = arith.addf %226, %227 : vector<8x128xf32>
    %229 = math.tanh %228 : vector<8x128xf32>
    %230 = arith.mulf %225, %229 : vector<8x128xf32>
    %c7_i32 = arith.constant 7 : i32
    %c8_i32_57 = arith.constant 8 : i32
    %231 = arith.muli %c7_i32, %c8_i32_57 : i32
    %232 = tpu.assume_multiple %231, 8 : i32
    %233 = arith.index_cast %232 : i32 to index
    %c0_58 = arith.constant 0 : index
    %234 = vector.load %arg7[%233, %c0_58] : memref<64x512xf32, #tpu.memory_space<vmem>>, vector<8x512xf32>
    %cst_59 = arith.constant dense<0.000000e+00> : vector<8x512xf32>
    %235 = tpu.matmul %230, %11, %cst_59 {dimension_numbers = #tpu.dot_dimension_numbers<[1], [0], [0], [1], [0, 0, 1, 1], [], []>} : vector<8x128xf32>, vector<128x512xf32>, vector<8x512xf32> -> vector<8x512xf32>
    %236 = arith.addf %234, %235 : vector<8x512xf32>
    %237 = vector.extract_strided_slice %236 {offsets = [0, 0], sizes = [8, 128], strides = [1, 1]} : vector<8x512xf32> to vector<8x128xf32>
    %238 = arith.negf %237 : vector<8x128xf32>
    %239 = math.exp %238 : vector<8x128xf32>
    %cst_60 = arith.constant 1.000000e+00 : f32
    %240 = vector.broadcast %cst_60 : f32 to vector<8x128xf32>
    %241 = arith.addf %240, %239 : vector<8x128xf32>
    %242 = arith.divf %240, %241 : vector<8x128xf32>
    %243 = vector.extract_strided_slice %236 {offsets = [0, 128], sizes = [8, 128], strides = [1, 1]} : vector<8x512xf32> to vector<8x128xf32>
    %244 = arith.negf %243 : vector<8x128xf32>
    %245 = math.exp %244 : vector<8x128xf32>
    %cst_61 = arith.constant 1.000000e+00 : f32
    %246 = vector.broadcast %cst_61 : f32 to vector<8x128xf32>
    %247 = arith.addf %246, %245 : vector<8x128xf32>
    %248 = arith.divf %246, %247 : vector<8x128xf32>
    %249 = vector.extract_strided_slice %236 {offsets = [0, 256], sizes = [8, 128], strides = [1, 1]} : vector<8x512xf32> to vector<8x128xf32>
    %250 = math.tanh %249 : vector<8x128xf32>
    %251 = vector.extract_strided_slice %236 {offsets = [0, 384], sizes = [8, 128], strides = [1, 1]} : vector<8x512xf32> to vector<8x128xf32>
    %252 = arith.negf %251 : vector<8x128xf32>
    %253 = math.exp %252 : vector<8x128xf32>
    %cst_62 = arith.constant 1.000000e+00 : f32
    %254 = vector.broadcast %cst_62 : f32 to vector<8x128xf32>
    %255 = arith.addf %254, %253 : vector<8x128xf32>
    %256 = arith.divf %254, %255 : vector<8x128xf32>
    %257 = arith.mulf %248, %228 : vector<8x128xf32>
    %258 = arith.mulf %242, %250 : vector<8x128xf32>
    %259 = arith.addf %257, %258 : vector<8x128xf32>
    %260 = math.tanh %259 : vector<8x128xf32>
    %261 = arith.mulf %256, %260 : vector<8x128xf32>
    %c8_i32_63 = arith.constant 8 : i32
    %c0_64 = arith.constant 0 : index
    %c0_65 = arith.constant 0 : index
    %262 = vector.load %arg8[%c0_64, %c0_65] : memref<8x128xf32, #tpu.memory_space<vmem>>, vector<8x128xf32>
    tpu.vector_store %arg8[%c0_64, %c0_65], %261 {strides = array<i32>} : memref<8x128xf32, #tpu.memory_space<vmem>>, vector<8x128xf32>,
    %c0_66 = arith.constant 0 : index
    %c0_67 = arith.constant 0 : index
    %263 = vector.load %arg9[%c0_66, %c0_67] : memref<8x128xf32, #tpu.memory_space<vmem>>, vector<8x128xf32>
    tpu.vector_store %arg9[%c0_66, %c0_67], %259 {strides = array<i32>} : memref<8x128xf32, #tpu.memory_space<vmem>>, vector<8x128xf32>,
    %c0_i32_68 = arith.constant 0 : i32
    %264 = arith.cmpi eq, %arg1, %c0_i32_68 : i32
    %265 = arith.extui %264 : i1 to i32
    %c0_i32_69 = arith.constant 0 : i32
    %266 = arith.cmpi ne, %265, %c0_i32_69 : i32
    scf.if %266 {
      %c0_70 = arith.constant 0 : index
      %c0_71 = arith.constant 0 : index
      %267 = vector.load %arg6[%c0_70, %c0_71] : memref<8x128xf32, #tpu.memory_space<vmem>>, vector<8x128xf32>
      tpu.vector_store %arg6[%c0_70, %c0_71], %261 {strides = array<i32>} : memref<8x128xf32, #tpu.memory_space<vmem>>, vector<8x128xf32>,
    } else {
    }
    return
  }
  func.func @transform_0(%arg0: i32, %arg1: i32) -> (i32, i32, i32) {
    %c0_i32 = arith.constant 0 : i32
    %c0_i32_0 = arith.constant 0 : i32
    return %arg1, %arg0, %c0_i32 : i32, i32, i32
  }
  func.func @transform_1(%arg0: i32, %arg1: i32) -> (i32, i32) {
    %c0_i32 = arith.constant 0 : i32
    %c0_i32_0 = arith.constant 0 : i32
    %c0_i32_1 = arith.constant 0 : i32
    return %c0_i32, %c0_i32_0 : i32, i32
  }
  func.func @transform_2(%arg0: i32, %arg1: i32) -> (i32, i32) {
    %c0_i32 = arith.constant 0 : i32
    %c0_i32_0 = arith.constant 0 : i32
    %c0_i32_1 = arith.constant 0 : i32
    return %c0_i32, %c0_i32_0 : i32, i32
  }
  func.func @transform_3(%arg0: i32, %arg1: i32) -> (i32, i32) {
    %c0_i32 = arith.constant 0 : i32
    %c0_i32_0 = arith.constant 0 : i32
    %c0_i32_1 = arith.constant 0 : i32
    return %c0_i32, %c0_i32_0 : i32, i32
  }
  func.func @transform_4(%arg0: i32, %arg1: i32) -> (i32, i32) {
    %c0_i32 = arith.constant 0 : i32
    %c0_i32_0 = arith.constant 0 : i32
    return %arg0, %c0_i32 : i32, i32
  }
}

</mosaic_0001>

<llo_original>
// kernel: text_generation_forward.3
$region0: #{text_generation_forward.3}
  #allocation0 [shape = 'u32[]', space=smem, size = 0x4, offset = 0x4, fixed_abs, tag = 'smem constant byte address 0x4 - core index']
  #allocation1 [shape = 'u32[144,128]{1,0:T(1,128)}', space=vmem, size = 0x12000, scoped, tag = 'internal scratch']
  %s0 = inlined_call_operand.vmem [shape: f32[8,128], index: 0, kind: input, shape index: {}]
  %s1 = inlined_call_operand.vmem [shape: f32[128,128], index: 1, kind: input, shape index: {}]
  %s2 = inlined_call_operand.vmem [shape: f32[1,128], index: 2, kind: input, shape index: {}]
  %s3 = inlined_call_operand.vmem [shape: f32[8,128], index: 3, kind: output, shape index: {}]
  %s4 = sld [smem:[#allocation0]]
  $region22: #{text_generation_forward.3} parent=0
    _
  %s6 = ssub.s32 1, %s4
  %s7 = scalar_select 0, %s6, %s4
  // Predicated region
  $region2: #{text_generation_forward.3} parent=0 // pred_check
    _
  $region3: #{text_generation_forward.3} parent=0 // pred_check_branch
    %9 = sbr.rel (0) target = $region5
  $region4: #{text_generation_forward.3} parent=0 // pred_region
    _
  $region5: #{text_generation_forward.3} parent=0 // pred_fallthru
    _
  // Predicated region
  $region6: #{text_generation_forward.3} parent=0 // pred_check
    _
  $region7: #{text_generation_forward.3} parent=0 // pred_check_branch
    %11 = sbr.rel (0) target = $region9
  $region8: #{text_generation_forward.3} parent=0 // pred_region
    _
  $region9: #{text_generation_forward.3} parent=0 // pred_fallthru
    _
  // Predicated region
  $region10: #{text_generation_forward.3} parent=0 // pred_check
    _
  $region11: #{text_generation_forward.3} parent=0 // pred_check_branch
    %13 = sbr.rel (0) target = $region13
  $region12: #{text_generation_forward.3} parent=0 // pred_region
    _
  $region13: #{text_generation_forward.3} parent=0 // pred_fallthru
    _
  %v14 = vld [vmem:[%s0] sm:$0xff]
  %v15 = vld [vmem:[%s1] sm:$0xff]
  %v16 = vld [vmem:[%s1 + $0x8] sm:$0xff]
  %v17 = vld [vmem:[%s1 + $0x10] sm:$0xff]
  %v18 = vld [vmem:[%s1 + $0x18] sm:$0xff]
  %v19 = vld [vmem:[%s1 + $0x20] sm:$0xff]
  %v20 = vld [vmem:[%s1 + $0x28] sm:$0xff]
  %v21 = vld [vmem:[%s1 + $0x30] sm:$0xff]
  %v22 = vld [vmem:[%s1 + $0x38] sm:$0xff]
  %v23 = vld [vmem:[%s1 + $0x40] sm:$0xff]
  %v24 = vld [vmem:[%s1 + $0x48] sm:$0xff]
  %v25 = vld [vmem:[%s1 + $0x50] sm:$0xff]
  %v26 = vld [vmem:[%s1 + $0x58] sm:$0xff]
  %v27 = vld [vmem:[%s1 + $0x60] sm:$0xff]
  %v28 = vld [vmem:[%s1 + $0x68] sm:$0xff]
  %v29 = vld [vmem:[%s1 + $0x70] sm:$0xff]
  %v30 = vld [vmem:[%s1 + $0x78] sm:$0xff]
  %v31 = vld [vmem:[%s2] sm:$0x1]
  %v33 = vlaneseq
  %v34 = vshrl.u32 %v33, 7
  %v35 = vsub.s32 0, %v34
  %v36 = vrot.slane %v31, %v35
  %38 = vmatprep.subr.mxu0 0.0
  %39 = vmatpush1.msra.mxu0 %v30
  %40 = vmatprep.subr.mxu0 0.0
  %41 = vmatpush1.msra.mxu0 %v29
  %42 = vmatprep.subr.mxu0 0.0
  %43 = vmatpush1.msra.mxu0 %v28
  %44 = vmatprep.subr.mxu0 0.0
  %45 = vmatpush1.msra.mxu0 %v27
  %46 = vmatprep.subr.mxu0 0.0
  %47 = vmatpush1.msra.mxu0 %v26
  %48 = vmatprep.subr.mxu0 0.0
  %49 = vmatpush1.msra.mxu0 %v25
  %50 = vmatprep.subr.mxu0 0.0
  %51 = vmatpush1.msra.mxu0 %v24
  %52 = vmatprep.subr.mxu0 0.0
  %53 = vmatpush1.msra.mxu0 %v23
  %54 = vmatprep.subr.mxu0 0.0
  %55 = vmatpush1.msra.mxu0 %v22
  %56 = vmatprep.subr.mxu0 0.0
  %57 = vmatpush1.msra.mxu0 %v21
  %58 = vmatprep.subr.mxu0 0.0
  %59 = vmatpush1.msra.mxu0 %v20
  %60 = vmatprep.subr.mxu0 0.0
  %61 = vmatpush1.msra.mxu0 %v19
  %62 = vmatprep.subr.mxu0 0.0
  %63 = vmatpush1.msra.mxu0 %v18
  %64 = vmatprep.subr.mxu0 0.0
  %65 = vmatpush1.msra.mxu0 %v17
  %66 = vmatprep.subr.mxu0 0.0
  %67 = vmatpush1.msra.mxu0 %v16
  %68 = vmatprep.subr.mxu0 0.0
  %69 = vmatpush1.msra.mxu0 %v15
  %70 = vmatprep.subr.mxu0 0.0
  %71 = vmatpush2.msra.mxu0 0.0
  %72 = vmatprep.subr.mxu0 0.0
  %73 = vmatpush2.msra.mxu0 0.0
  %74 = vmatprep.subr.mxu0 0.0
  %75 = vmatpush2.msra.mxu0 0.0
  %76 = vmatprep.subr.mxu0 0.0
  %77 = vmatpush2.msra.mxu0 0.0
  %78 = vmatprep.subr.mxu0 0.0
  %79 = vmatpush2.msra.mxu0 0.0
  %80 = vmatprep.subr.mxu0 0.0
  %81 = vmatpush2.msra.mxu0 0.0
  %82 = vmatprep.subr.mxu0 0.0
  %83 = vmatpush2.msra.mxu0 0.0
  %84 = vmatprep.subr.mxu0 0.0
  %85 = vmatpush2.msra.mxu0 0.0
  %86 = vmatprep.subr.mxu0 0.0
  %87 = vmatpush2.msra.mxu0 0.0
  %88 = vmatprep.subr.mxu0 0.0
  %89 = vmatpush2.msra.mxu0 0.0
  %90 = vmatprep.subr.mxu0 0.0
  %91 = vmatpush2.msra.mxu0 0.0
  %92 = vmatprep.subr.mxu0 0.0
  %93 = vmatpush2.msra.mxu0 0.0
  %94 = vmatprep.subr.mxu0 0.0
  %95 = vmatpush2.msra.mxu0 0.0
  %96 = vmatprep.subr.mxu0 0.0
  %97 = vmatpush2.msra.mxu0 0.0
  %98 = vmatprep.subr.mxu0 0.0
  %99 = vmatpush2.msra.mxu0 0.0
  %100 = vmatprep.subr.mxu0 0.0
  %101 = vmatpush2.msra.mxu0 0.0
  %102 = vmatprep.mubr.f32.mxu0 0.0
  %103 = vmatmul.mubr.f32.gmra.mxu0 %v14
  %v104 = vpop.f32.mrf.mxu0
  %v105 = vadd.f32 %v36, %v104
  %v106 = vpop.f32.mrf.mxu0
  %107 = vdwg.mxu0
  %108 = vst [vmem:[%s3] sm:$0xff] %v105
  // Predicated region
  $region14: #{text_generation_forward.3} parent=0 // pred_check
    _
  $region15: #{text_generation_forward.3} parent=0 // pred_check_branch
    %110 = sbr.rel (0) target = $region17
  $region16: #{text_generation_forward.3} parent=0 // pred_region
    _
  $region17: #{text_generation_forward.3} parent=0 // pred_fallthru
    _
  // Predicated region
  $region18: #{text_generation_forward.3} parent=0 // pred_check
    _
  $region19: #{text_generation_forward.3} parent=0 // pred_check_branch
    %112 = sbr.rel (0) target = $region21
  $region20: #{text_generation_forward.3} parent=0 // pred_region
    _
  $region21: #{text_generation_forward.3} parent=0 // pred_fallthru
    _

// kernel: text_generation_forward.2
$region0: #{text_generation_forward.2}
  #allocation0 [shape = 'u32[]', space=smem, size = 0x4, offset = 0x4, fixed_abs, tag = 'smem constant byte address 0x4 - core index']
  #allocation1 [shape = 'u32[144,128]{1,0:T(1,128)}', space=vmem, size = 0x12000, scoped, tag = 'internal scratch']
  #allocation2 [shape = 'f32[64,512]{1,0:T(8,128)}', space=vmem, size = 0x20000, scoped, tag = 'scratch operand']
  #allocation3 [shape = 'f32[8,128]{1,0:T(8,128)}', space=vmem, size = 0x1000, scoped, tag = 'scratch operand']
  #allocation4 [shape = 'f32[8,128]{1,0:T(8,128)}', space=vmem, size = 0x1000, scoped, tag = 'scratch operand']
  %s0 = inlined_call_operand.vmem [shape: f32[8,8,128], index: 0, kind: input, shape index: {}]
  %s1 = inlined_call_operand.vmem [shape: f32[128,512], index: 1, kind: input, shape index: {}]
  %s2 = inlined_call_operand.vmem [shape: f32[128,512], index: 2, kind: input, shape index: {}]
  %s3 = inlined_call_operand.vmem [shape: f32[1,512], index: 3, kind: input, shape index: {}]
  %s4 = inlined_call_operand.vmem [shape: f32[8,128], index: 4, kind: output, shape index: {}]
  %s5 = sld [smem:[#allocation0]]
  $region34: #{text_generation_forward.2} parent=0
    _
  %s7 = ssub.s32 1, %s5
  %s8 = scalar_select 0, %s7, %s5
  // Predicated region
  $region2: #{text_generation_forward.2} parent=0 // pred_check
    _
  $region3: #{text_generation_forward.2} parent=0 // pred_check_branch
    %10 = sbr.rel (0) target = $region5
  $region4: #{text_generation_forward.2} parent=0 // pred_region
    _
  $region5: #{text_generation_forward.2} parent=0 // pred_fallthru
    _
  // Predicated region
  $region6: #{text_generation_forward.2} parent=0 // pred_check
    _
  $region7: #{text_generation_forward.2} parent=0 // pred_check_branch
    %12 = sbr.rel (0) target = $region9
  $region8: #{text_generation_forward.2} parent=0 // pred_region
    _
  $region9: #{text_generation_forward.2} parent=0 // pred_fallthru
    _
  // Predicated region
  $region10: #{text_generation_forward.2} parent=0 // pred_check
    _
  $region11: #{text_generation_forward.2} parent=0 // pred_check_branch
    %14 = sbr.rel (0) target = $region13
  $region12: #{text_generation_forward.2} parent=0 // pred_region
    _
  $region13: #{text_generation_forward.2} parent=0 // pred_fallthru
    _
  // Predicated region
  $region14: #{text_generation_forward.2} parent=0 // pred_check
    _
  $region15: #{text_generation_forward.2} parent=0 // pred_check_branch
    %16 = sbr.rel (0) target = $region17
  $region16: #{text_generation_forward.2} parent=0 // pred_region
    _
  $region17: #{text_generation_forward.2} parent=0 // pred_fallthru
    _
  %p17 = scmp.eq.s32.totalorder 0, 0
  // Predicated region
  $region18: #{text_generation_forward.2} parent=0 // pred_check
    %p18 = pneg %p17
  $region19: #{text_generation_forward.2} parent=0 // pred_check_branch
    %20 = sbr.rel (%p18) target = $region21
  $region20: #{text_generation_forward.2} parent=0 // pred_region
    %21 = vst [vmem:[#allocation3] sm:$0xff] 0.0
    %22 = vst [vmem:[#allocation4] sm:$0xff] 0.0
  $region21: #{text_generation_forward.2} parent=0 // pred_fallthru
    _
  %v23 = vld [vmem:[%s0] sm:$0xff]
  %v24 = vld [vmem:[%s0 + $0x8] sm:$0xff]
  %v25 = vld [vmem:[%s0 + $0x10] sm:$0xff]
  %v26 = vld [vmem:[%s0 + $0x18] sm:$0xff]
  %v27 = vld [vmem:[%s0 + $0x20] sm:$0xff]
  %v28 = vld [vmem:[%s0 + $0x28] sm:$0xff]
  %v29 = vld [vmem:[%s0 + $0x30] sm:$0xff]
  %v30 = vld [vmem:[%s0 + $0x38] sm:$0xff]
  %v31 = vld [vmem:[%s1] sm:$0xff]
  %v32 = vld [vmem:[%s1 + $0x8] sm:$0xff]
  %v33 = vld [vmem:[%s1 + $0x10] sm:$0xff]
  %v34 = vld [vmem:[%s1 + $0x18] sm:$0xff]
  %v35 = vld [vmem:[%s1 + $0x20] sm:$0xff]
  %v36 = vld [vmem:[%s1 + $0x28] sm:$0xff]
  %v37 = vld [vmem:[%s1 + $0x30] sm:$0xff]
  %v38 = vld [vmem:[%s1 + $0x38] sm:$0xff]
  %v39 = vld [vmem:[%s1 + $0x40] sm:$0xff]
  %v40 = vld [vmem:[%s1 + $0x48] sm:$0xff]
  %v41 = vld [vmem:[%s1 + $0x50] sm:$0xff]
  %v42 = vld [vmem:[%s1 + $0x58] sm:$0xff]
  %v43 = vld [vmem:[%s1 + $0x60] sm:$0xff]
  %v44 = vld [vmem:[%s1 + $0x68] sm:$0xff]
  %v45 = vld [vmem:[%s1 + $0x70] sm:$0xff]
  %v46 = vld [vmem:[%s1 + $0x78] sm:$0xff]
  %v47 = vld [vmem:[%s1 + $0x80] sm:$0xff]
  %v48 = vld [vmem:[%s1 + $0x88] sm:$0xff]
  %v49 = vld [vmem:[%s1 + $0x90] sm:$0xff]
  %v50 = vld [vmem:[%s1 + $0x98] sm:$0xff]
  %v51 = vld [vmem:[%s1 + $0xa0] sm:$0xff]
  %v52 = vld [vmem:[%s1 + $0xa8] sm:$0xff]
  %v53 = vld [vmem:[%s1 + $0xb0] sm:$0xff]
  %v54 = vld [vmem:[%s1 + $0xb8] sm:$0xff]
  %v55 = vld [vmem:[%s1 + $0xc0] sm:$0xff]
  %v56 = vld [vmem:[%s1 + $0xc8] sm:$0xff]
  %v57 = vld [vmem:[%s1 + $0xd0] sm:$0xff]
  %v58 = vld [vmem:[%s1 + $0xd8] sm:$0xff]
  %v59 = vld [vmem:[%s1 + $0xe0] sm:$0xff]
  %v60 = vld [vmem:[%s1 + $0xe8] sm:$0xff]
  %v61 = vld [vmem:[%s1 + $0xf0] sm:$0xff]
  %v62 = vld [vmem:[%s1 + $0xf8] sm:$0xff]
  %v63 = vld [vmem:[%s1 + $0x100] sm:$0xff]
  %v64 = vld [vmem:[%s1 + $0x108] sm:$0xff]
  %v65 = vld [vmem:[%s1 + $0x110] sm:$0xff]
  %v66 = vld [vmem:[%s1 + $0x118] sm:$0xff]
  %v67 = vld [vmem:[%s1 + $0x120] sm:$0xff]
  %v68 = vld [vmem:[%s1 + $0x128] sm:$0xff]
  %v69 = vld [vmem:[%s1 + $0x130] sm:$0xff]
  %v70 = vld [vmem:[%s1 + $0x138] sm:$0xff]
  %v71 = vld [vmem:[%s1 + $0x140] sm:$0xff]
  %v72 = vld [vmem:[%s1 + $0x148] sm:$0xff]
  %v73 = vld [vmem:[%s1 + $0x150] sm:$0xff]
  %v74 = vld [vmem:[%s1 + $0x158] sm:$0xff]
  %v75 = vld [vmem:[%s1 + $0x160] sm:$0xff]
  %v76 = vld [vmem:[%s1 + $0x168] sm:$0xff]
  %v77 = vld [vmem:[%s1 + $0x170] sm:$0xff]
  %v78 = vld [vmem:[%s1 + $0x178] sm:$0xff]
  %v79 = vld [vmem:[%s1 + $0x180] sm:$0xff]
  %v80 = vld [vmem:[%s1 + $0x188] sm:$0xff]
  %v81 = vld [vmem:[%s1 + $0x190] sm:$0xff]
  %v82 = vld [vmem:[%s1 + $0x198] sm:$0xff]
  %v83 = vld [vmem:[%s1 + $0x1a0] sm:$0xff]
  %v84 = vld [vmem:[%s1 + $0x1a8] sm:$0xff]
  %v85 = vld [vmem:[%s1 + $0x1b0] sm:$0xff]
  %v86 = vld [vmem:[%s1 + $0x1b8] sm:$0xff]
  %v87 = vld [vmem:[%s1 + $0x1c0] sm:$0xff]
  %v88 = vld [vmem:[%s1 + $0x1c8] sm:$0xff]
  %v89 = vld [vmem:[%s1 + $0x1d0] sm:$0xff]
  %v90 = vld [vmem:[%s1 + $0x1d8] sm:$0xff]
  %v91 = vld [vmem:[%s1 + $0x1e0] sm:$0xff]
  %v92 = vld [vmem:[%s1 + $0x1e8] sm:$0xff]
  %v93 = vld [vmem:[%s1 + $0x1f0] sm:$0xff]
  %v94 = vld [vmem:[%s1 + $0x1f8] sm:$0xff]
  %v95 = vld [vmem:[%s3] sm:$0xf]
  %v97 = vlaneseq
  %v98 = vshrl.u32 %v97, 7
  %v99 = vsub.s32 0, %v98
  %v100 = vrot.slane %v95, %v99
  %v101 = vlaneseq
  %v102 = vshrl.u32 %v101, 7
  %v103 = vsub.s32 1, %v102
  %v104 = vrot.slane %v95, %v103
  %v105 = vlaneseq
  %v106 = vshrl.u32 %v105, 7
  %v107 = vsub.s32 2, %v106
  %v108 = vrot.slane %v95, %v107
  %v109 = vlaneseq
  %v110 = vshrl.u32 %v109, 7
  %v111 = vsub.s32 3, %v110
  %v112 = vrot.slane %v95, %v111
  %117 = vmatprep.subr.mxu0 %v92
  %118 = vmatpush1.msra.mxu0 %v91
  %119 = vmatprep.subr.mxu0 %v88
  %120 = vmatpush1.msra.mxu0 %v87
  %121 = vmatprep.subr.mxu0 %v84
  %122 = vmatpush1.msra.mxu0 %v83
  %123 = vmatprep.subr.mxu0 %v80
  %124 = vmatpush1.msra.mxu0 %v79
  %125 = vmatprep.subr.mxu0 %v76
  %126 = vmatpush1.msra.mxu0 %v75
  %127 = vmatprep.subr.mxu0 %v72
  %128 = vmatpush1.msra.mxu0 %v71
  %129 = vmatprep.subr.mxu0 %v68
  %130 = vmatpush1.msra.mxu0 %v67
  %131 = vmatprep.subr.mxu0 %v64
  %132 = vmatpush1.msra.mxu0 %v63
  %133 = vmatprep.subr.mxu0 %v60
  %134 = vmatpush1.msra.mxu0 %v59
  %135 = vmatprep.subr.mxu0 %v56
  %136 = vmatpush1.msra.mxu0 %v55
  %137 = vmatprep.subr.mxu0 %v52
  %138 = vmatpush1.msra.mxu0 %v51
  %139 = vmatprep.subr.mxu0 %v48
  %140 = vmatpush1.msra.mxu0 %v47
  %141 = vmatprep.subr.mxu0 %v44
  %142 = vmatpush1.msra.mxu0 %v43
  %143 = vmatprep.subr.mxu0 %v40
  %144 = vmatpush1.msra.mxu0 %v39
  %145 = vmatprep.subr.mxu0 %v36
  %146 = vmatpush1.msra.mxu0 %v35
  %147 = vmatprep.subr.mxu0 %v32
  %148 = vmatpush1.msra.mxu0 %v31
  %149 = vmatprep.subr.mxu0 0.0
  %150 = vmatpush2.msra.mxu0 0.0
  %151 = vmatprep.subr.mxu0 0.0
  %152 = vmatpush2.msra.mxu0 0.0
  %153 = vmatprep.subr.mxu0 0.0
  %154 = vmatpush2.msra.mxu0 0.0
  %155 = vmatprep.subr.mxu0 0.0
  %156 = vmatpush2.msra.mxu0 0.0
  %157 = vmatprep.subr.mxu0 0.0
  %158 = vmatpush2.msra.mxu0 0.0
  %159 = vmatprep.subr.mxu0 0.0
  %160 = vmatpush2.msra.mxu0 0.0
  %161 = vmatprep.subr.mxu0 0.0
  %162 = vmatpush2.msra.mxu0 0.0
  %163 = vmatprep.subr.mxu0 0.0
  %164 = vmatpush2.msra.mxu0 0.0
  %165 = vmatprep.subr.mxu0 0.0
  %166 = vmatpush2.msra.mxu0 0.0
  %167 = vmatprep.subr.mxu0 0.0
  %168 = vmatpush2.msra.mxu0 0.0
  %169 = vmatprep.subr.mxu0 0.0
  %170 = vmatpush2.msra.mxu0 0.0
  %171 = vmatprep.subr.mxu0 0.0
  %172 = vmatpush2.msra.mxu0 0.0
  %173 = vmatprep.subr.mxu0 0.0
  %174 = vmatpush2.msra.mxu0 0.0
  %175 = vmatprep.subr.mxu0 0.0
  %176 = vmatpush2.msra.mxu0 0.0
  %177 = vmatprep.subr.mxu0 0.0
  %178 = vmatpush2.msra.mxu0 0.0
  %179 = vmatprep.subr.mxu0 0.0
  %180 = vmatpush2.msra.mxu0 0.0
  %181 = vmatprep.mubr.f32.mxu0 0.0
  %182 = vmatmul.mubr.f32.gmra.mxu0 %v23
  %v183 = vpop.f32.mrf.mxu0
  %v184 = vadd.f32 %v100, %v183
  %v185 = vpop.f32.mrf.mxu0
  %v186 = vadd.f32 %v104, %v185
  %187 = vmatprep.mubr.f32.mxu0 0.0
  %188 = vmatmul.mubr.f32.gmra.mxu0 %v24
  %v189 = vpop.f32.mrf.mxu0
  %v190 = vadd.f32 %v100, %v189
  %v191 = vpop.f32.mrf.mxu0
  %v192 = vadd.f32 %v104, %v191
  %193 = vmatprep.mubr.f32.mxu0 0.0
  %194 = vmatmul.mubr.f32.gmra.mxu0 %v25
  %v195 = vpop.f32.mrf.mxu0
  %v196 = vadd.f32 %v100, %v195
  %v197 = vpop.f32.mrf.mxu0
  %v198 = vadd.f32 %v104, %v197
  %199 = vmatprep.mubr.f32.mxu0 0.0
  %200 = vmatmul.mubr.f32.gmra.mxu0 %v26
  %v201 = vpop.f32.mrf.mxu0
  %v202 = vadd.f32 %v100, %v201
  %v203 = vpop.f32.mrf.mxu0
  %v204 = vadd.f32 %v104, %v203
  %205 = vmatprep.mubr.f32.mxu0 0.0
  %206 = vmatmul.mubr.f32.gmra.mxu0 %v27
  %v207 = vpop.f32.mrf.mxu0
  %v208 = vadd.f32 %v100, %v207
  %v209 = vpop.f32.mrf.mxu0
  %v210 = vadd.f32 %v104, %v209
  %211 = vmatprep.mubr.f32.mxu0 0.0
  %212 = vmatmul.mubr.f32.gmra.mxu0 %v28
  %v213 = vpop.f32.mrf.mxu0
  %v214 = vadd.f32 %v100, %v213
  %v215 = vpop.f32.mrf.mxu0
  %v216 = vadd.f32 %v104, %v215
  %217 = vmatprep.mubr.f32.mxu0 0.0
  %218 = vmatmul.mubr.f32.gmra.mxu0 %v29
  %v219 = vpop.f32.mrf.mxu0
  %v220 = vadd.f32 %v100, %v219
  %v221 = vpop.f32.mrf.mxu0
  %v222 = vadd.f32 %v104, %v221
  %223 = vmatprep.mubr.f32.mxu0 0.0
  %224 = vmatmul.mubr.f32.gmra.mxu0 %v30
  %v225 = vpop.f32.mrf.mxu0
  %v226 = vadd.f32 %v100, %v225
  %v227 = vpop.f32.mrf.mxu0
  %v228 = vadd.f32 %v104, %v227
  %229 = vdwg.mxu0
  %230 = vmatprep.subr.mxu0 %v94
  %231 = vmatpush1.msra.mxu0 %v93
  %232 = vmatprep.subr.mxu0 %v90
  %233 = vmatpush1.msra.mxu0 %v89
  %234 = vmatprep.subr.mxu0 %v86
  %235 = vmatpush1.msra.mxu0 %v85
  %236 = vmatprep.subr.mxu0 %v82
  %237 = vmatpush1.msra.mxu0 %v81
  %238 = vmatprep.subr.mxu0 %v78
  %239 = vmatpush1.msra.mxu0 %v77
  %240 = vmatprep.subr.mxu0 %v74
  %241 = vmatpush1.msra.mxu0 %v73
  %242 = vmatprep.subr.mxu0 %v70
  %243 = vmatpush1.msra.mxu0 %v69
  %244 = vmatprep.subr.mxu0 %v66
  %245 = vmatpush1.msra.mxu0 %v65
  %246 = vmatprep.subr.mxu0 %v62
  %247 = vmatpush1.msra.mxu0 %v61
  %248 = vmatprep.subr.mxu0 %v58
  %249 = vmatpush1.msra.mxu0 %v57
  %250 = vmatprep.subr.mxu0 %v54
  %251 = vmatpush1.msra.mxu0 %v53
  %252 = vmatprep.subr.mxu0 %v50
  %253 = vmatpush1.msra.mxu0 %v49
  %254 = vmatprep.subr.mxu0 %v46
  %255 = vmatpush1.msra.mxu0 %v45
  %256 = vmatprep.subr.mxu0 %v42
  %257 = vmatpush1.msra.mxu0 %v41
  %258 = vmatprep.subr.mxu0 %v38
  %259 = vmatpush1.msra.mxu0 %v37
  %260 = vmatprep.subr.mxu0 %v34
  %261 = vmatpush1.msra.mxu0 %v33
  %262 = vmatprep.subr.mxu0 0.0
  %263 = vmatpush2.msra.mxu0 0.0
  %264 = vmatprep.subr.mxu0 0.0
  %265 = vmatpush2.msra.mxu0 0.0
  %266 = vmatprep.subr.mxu0 0.0
  %267 = vmatpush2.msra.mxu0 0.0
  %268 = vmatprep.subr.mxu0 0.0
  %269 = vmatpush2.msra.mxu0 0.0
  %270 = vmatprep.subr.mxu0 0.0
  %271 = vmatpush2.msra.mxu0 0.0
  %272 = vmatprep.subr.mxu0 0.0
  %273 = vmatpush2.msra.mxu0 0.0
  %274 = vmatprep.subr.mxu0 0.0
  %275 = vmatpush2.msra.mxu0 0.0
  %276 = vmatprep.subr.mxu0 0.0
  %277 = vmatpush2.msra.mxu0 0.0
  %278 = vmatprep.subr.mxu0 0.0
  %279 = vmatpush2.msra.mxu0 0.0
  %280 = vmatprep.subr.mxu0 0.0
  %281 = vmatpush2.msra.mxu0 0.0
  %282 = vmatprep.subr.mxu0 0.0
  %283 = vmatpush2.msra.mxu0 0.0
  %284 = vmatprep.subr.mxu0 0.0
  %285 = vmatpush2.msra.mxu0 0.0
  %286 = vmatprep.subr.mxu0 0.0
  %287 = vmatpush2.msra.mxu0 0.0
  %288 = vmatprep.subr.mxu0 0.0
  %289 = vmatpush2.msra.mxu0 0.0
  %290 = vmatprep.subr.mxu0 0.0
  %291 = vmatpush2.msra.mxu0 0.0
  %292 = vmatprep.subr.mxu0 0.0
  %293 = vmatpush2.msra.mxu0 0.0
  %294 = vmatprep.mubr.f32.mxu0 0.0
  %295 = vmatmul.mubr.f32.gmra.mxu0 %v23
  %v296 = vpop.f32.mrf.mxu0
  %v297 = vadd.f32 %v108, %v296
  %v298 = vpop.f32.mrf.mxu0
  %v299 = vadd.f32 %v112, %v298
  %300 = vmatprep.mubr.f32.mxu0 0.0
  %301 = vmatmul.mubr.f32.gmra.mxu0 %v24
  %v302 = vpop.f32.mrf.mxu0
  %v303 = vadd.f32 %v108, %v302
  %v304 = vpop.f32.mrf.mxu0
  %v305 = vadd.f32 %v112, %v304
  %306 = vmatprep.mubr.f32.mxu0 0.0
  %307 = vmatmul.mubr.f32.gmra.mxu0 %v25
  %v308 = vpop.f32.mrf.mxu0
  %v309 = vadd.f32 %v108, %v308
  %v310 = vpop.f32.mrf.mxu0
  %v311 = vadd.f32 %v112, %v310
  %312 = vmatprep.mubr.f32.mxu0 0.0
  %313 = vmatmul.mubr.f32.gmra.mxu0 %v26
  %v314 = vpop.f32.mrf.mxu0
  %v315 = vadd.f32 %v108, %v314
  %v316 = vpop.f32.mrf.mxu0
  %v317 = vadd.f32 %v112, %v316
  %318 = vmatprep.mubr.f32.mxu0 0.0
  %319 = vmatmul.mubr.f32.gmra.mxu0 %v27
  %v320 = vpop.f32.mrf.mxu0
  %v321 = vadd.f32 %v108, %v320
  %v322 = vpop.f32.mrf.mxu0
  %v323 = vadd.f32 %v112, %v322
  %324 = vmatprep.mubr.f32.mxu0 0.0
  %325 = vmatmul.mubr.f32.gmra.mxu0 %v28
  %v326 = vpop.f32.mrf.mxu0
  %v327 = vadd.f32 %v108, %v326
  %v328 = vpop.f32.mrf.mxu0
  %v329 = vadd.f32 %v112, %v328
  %330 = vmatprep.mubr.f32.mxu0 0.0
  %331 = vmatmul.mubr.f32.gmra.mxu0 %v29
  %v332 = vpop.f32.mrf.mxu0
  %v333 = vadd.f32 %v108, %v332
  %v334 = vpop.f32.mrf.mxu0
  %v335 = vadd.f32 %v112, %v334
  %336 = vmatprep.mubr.f32.mxu0 0.0
  %337 = vmatmul.mubr.f32.gmra.mxu0 %v30
  %v338 = vpop.f32.mrf.mxu0
  %v339 = vadd.f32 %v108, %v338
  %v340 = vpop.f32.mrf.mxu0
  %v341 = vadd.f32 %v112, %v340
  %342 = vdwg.mxu0
  %343 = vst [vmem:[#allocation2] sm:$0xff] %v184
  %344 = vst [vmem:[#allocation2 + $0x8] sm:$0xff] %v186
  %345 = vst [vmem:[#allocation2 + $0x10] sm:$0xff] %v297
  %346 = vst [vmem:[#allocation2 + $0x18] sm:$0xff] %v299
  %347 = vst [vmem:[#allocation2 + $0x20] sm:$0xff] %v190
  %348 = vst [vmem:[#allocation2 + $0x28] sm:$0xff] %v192
  %349 = vst [vmem:[#allocation2 + $0x30] sm:$0xff] %v303
  %350 = vst [vmem:[#allocation2 + $0x38] sm:$0xff] %v305
  %351 = vst [vmem:[#allocation2 + $0x40] sm:$0xff] %v196
  %352 = vst [vmem:[#allocation2 + $0x48] sm:$0xff] %v198
  %353 = vst [vmem:[#allocation2 + $0x50] sm:$0xff] %v309
  %354 = vst [vmem:[#allocation2 + $0x58] sm:$0xff] %v311
  %355 = vst [vmem:[#allocation2 + $0x60] sm:$0xff] %v202
  %356 = vst [vmem:[#allocation2 + $0x68] sm:$0xff] %v204
  %357 = vst [vmem:[#allocation2 + $0x70] sm:$0xff] %v315
  %358 = vst [vmem:[#allocation2 + $0x78] sm:$0xff] %v317
  %359 = vst [vmem:[#allocation2 + $0x80] sm:$0xff] %v208
  %360 = vst [vmem:[#allocation2 + $0x88] sm:$0xff] %v210
  %361 = vst [vmem:[#allocation2 + $0x90] sm:$0xff] %v321
  %362 = vst [vmem:[#allocation2 + $0x98] sm:$0xff] %v323
  %363 = vst [vmem:[#allocation2 + $0xa0] sm:$0xff] %v214
  %364 = vst [vmem:[#allocation2 + $0xa8] sm:$0xff] %v216
  %365 = vst [vmem:[#allocation2 + $0xb0] sm:$0xff] %v327
  %366 = vst [vmem:[#allocation2 + $0xb8] sm:$0xff] %v329
  %367 = vst [vmem:[#allocation2 + $0xc0] sm:$0xff] %v220
  %368 = vst [vmem:[#allocation2 + $0xc8] sm:$0xff] %v222
  %369 = vst [vmem:[#allocation2 + $0xd0] sm:$0xff] %v333
  %370 = vst [vmem:[#allocation2 + $0xd8] sm:$0xff] %v335
  %371 = vst [vmem:[#allocation2 + $0xe0] sm:$0xff] %v226
  %372 = vst [vmem:[#allocation2 + $0xe8] sm:$0xff] %v228
  %373 = vst [vmem:[#allocation2 + $0xf0] sm:$0xff] %v339
  %374 = vst [vmem:[#allocation2 + $0xf8] sm:$0xff] %v341
  %v375 = vld [vmem:[%s2] sm:$0xff]
  %v376 = vld [vmem:[%s2 + $0x8] sm:$0xff]
  %v377 = vld [vmem:[%s2 + $0x10] sm:$0xff]
  %v378 = vld [vmem:[%s2 + $0x18] sm:$0xff]
  %v379 = vld [vmem:[%s2 + $0x20] sm:$0xff]
  %v380 = vld [vmem:[%s2 + $0x28] sm:$0xff]
  %v381 = vld [vmem:[%s2 + $0x30] sm:$0xff]
  %v382 = vld [vmem:[%s2 + $0x38] sm:$0xff]
  %v383 = vld [vmem:[%s2 + $0x40] sm:$0xff]
  %v384 = vld [vmem:[%s2 + $0x48] sm:$0xff]
  %v385 = vld [vmem:[%s2 + $0x50] sm:$0xff]
  %v386 = vld [vmem:[%s2 + $0x58] sm:$0xff]
  %v387 = vld [vmem:[%s2 + $0x60] sm:$0xff]
  %v388 = vld [vmem:[%s2 + $0x68] sm:$0xff]
  %v389 = vld [vmem:[%s2 + $0x70] sm:$0xff]
  %v390 = vld [vmem:[%s2 + $0x78] sm:$0xff]
  %v391 = vld [vmem:[%s2 + $0x80] sm:$0xff]
  %v392 = vld [vmem:[%s2 + $0x88] sm:$0xff]
  %v393 = vld [vmem:[%s2 + $0x90] sm:$0xff]
  %v394 = vld [vmem:[%s2 + $0x98] sm:$0xff]
  %v395 = vld [vmem:[%s2 + $0xa0] sm:$0xff]
  %v396 = vld [vmem:[%s2 + $0xa8] sm:$0xff]
  %v397 = vld [vmem:[%s2 + $0xb0] sm:$0xff]
  %v398 = vld [vmem:[%s2 + $0xb8] sm:$0xff]
  %v399 = vld [vmem:[%s2 + $0xc0] sm:$0xff]
  %v400 = vld [vmem:[%s2 + $0xc8] sm:$0xff]
  %v401 = vld [vmem:[%s2 + $0xd0] sm:$0xff]
  %v402 = vld [vmem:[%s2 + $0xd8] sm:$0xff]
  %v403 = vld [vmem:[%s2 + $0xe0] sm:$0xff]
  %v404 = vld [vmem:[%s2 + $0xe8] sm:$0xff]
  %v405 = vld [vmem:[%s2 + $0xf0] sm:$0xff]
  %v406 = vld [vmem:[%s2 + $0xf8] sm:$0xff]
  %v407 = vld [vmem:[%s2 + $0x100] sm:$0xff]
  %v408 = vld [vmem:[%s2 + $0x108] sm:$0xff]
  %v409 = vld [vmem:[%s2 + $0x110] sm:$0xff]
  %v410 = vld [vmem:[%s2 + $0x118] sm:$0xff]
  %v411 = vld [vmem:[%s2 + $0x120] sm:$0xff]
  %v412 = vld [vmem:[%s2 + $0x128] sm:$0xff]
  %v413 = vld [vmem:[%s2 + $0x130] sm:$0xff]
  %v414 = vld [vmem:[%s2 + $0x138] sm:$0xff]
  %v415 = vld [vmem:[%s2 + $0x140] sm:$0xff]
  %v416 = vld [vmem:[%s2 + $0x148] sm:$0xff]
  %v417 = vld [vmem:[%s2 + $0x150] sm:$0xff]
  %v418 = vld [vmem:[%s2 + $0x158] sm:$0xff]
  %v419 = vld [vmem:[%s2 + $0x160] sm:$0xff]
  %v420 = vld [vmem:[%s2 + $0x168] sm:$0xff]
  %v421 = vld [vmem:[%s2 + $0x170] sm:$0xff]
  %v422 = vld [vmem:[%s2 + $0x178] sm:$0xff]
  %v423 = vld [vmem:[%s2 + $0x180] sm:$0xff]
  %v424 = vld [vmem:[%s2 + $0x188] sm:$0xff]
  %v425 = vld [vmem:[%s2 + $0x190] sm:$0xff]
  %v426 = vld [vmem:[%s2 + $0x198] sm:$0xff]
  %v427 = vld [vmem:[%s2 + $0x1a0] sm:$0xff]
  %v428 = vld [vmem:[%s2 + $0x1a8] sm:$0xff]
  %v429 = vld [vmem:[%s2 + $0x1b0] sm:$0xff]
  %v430 = vld [vmem:[%s2 + $0x1b8] sm:$0xff]
  %v431 = vld [vmem:[%s2 + $0x1c0] sm:$0xff]
  %v432 = vld [vmem:[%s2 + $0x1c8] sm:$0xff]
  %v433 = vld [vmem:[%s2 + $0x1d0] sm:$0xff]
  %v434 = vld [vmem:[%s2 + $0x1d8] sm:$0xff]
  %v435 = vld [vmem:[%s2 + $0x1e0] sm:$0xff]
  %v436 = vld [vmem:[%s2 + $0x1e8] sm:$0xff]
  %v437 = vld [vmem:[%s2 + $0x1f0] sm:$0xff]
  %v438 = vld [vmem:[%s2 + $0x1f8] sm:$0xff]
  %v439 = vld [vmem:[#allocation3] sm:$0xff]
  %v440 = vld [vmem:[#allocation4] sm:$0xff]
  %s441 = smul.u32 0, 4
  %s442 = smul.addr %s441, 8
  %s443 = scalar_lea.vmem [#allocation2], %s442
  %v444 = vld [vmem:[%s443] sm:$0xff]
  %v445 = vld [vmem:[%s443 + $0x8] sm:$0xff]
  %v446 = vld [vmem:[%s443 + $0x10] sm:$0xff]
  %v447 = vld [vmem:[%s443 + $0x18] sm:$0xff]
  %448 = vmatprep.subr.mxu0 %v436
  %449 = vmatpush1.msra.mxu0 %v435
  %450 = vmatprep.subr.mxu0 %v432
  %451 = vmatpush1.msra.mxu0 %v431
  %452 = vmatprep.subr.mxu0 %v428
  %453 = vmatpush1.msra.mxu0 %v427
  %454 = vmatprep.subr.mxu0 %v424
  %455 = vmatpush1.msra.mxu0 %v423
  %456 = vmatprep.subr.mxu0 %v420
  %457 = vmatpush1.msra.mxu0 %v419
  %458 = vmatprep.subr.mxu0 %v416
  %459 = vmatpush1.msra.mxu0 %v415
  %460 = vmatprep.subr.mxu0 %v412
  %461 = vmatpush1.msra.mxu0 %v411
  %462 = vmatprep.subr.mxu0 %v408
  %463 = vmatpush1.msra.mxu0 %v407
  %464 = vmatprep.subr.mxu0 %v404
  %465 = vmatpush1.msra.mxu0 %v403
  %466 = vmatprep.subr.mxu0 %v400
  %467 = vmatpush1.msra.mxu0 %v399
  %468 = vmatprep.subr.mxu0 %v396
  %469 = vmatpush1.msra.mxu0 %v395
  %470 = vmatprep.subr.mxu0 %v392
  %471 = vmatpush1.msra.mxu0 %v391
  %472 = vmatprep.subr.mxu0 %v388
  %473 = vmatpush1.msra.mxu0 %v387
  %474 = vmatprep.subr.mxu0 %v384
  %475 = vmatpush1.msra.mxu0 %v383
  %476 = vmatprep.subr.mxu0 %v380
  %477 = vmatpush1.msra.mxu0 %v379
  %478 = vmatprep.subr.mxu0 %v376
  %479 = vmatpush1.msra.mxu0 %v375
  %480 = vmatprep.subr.mxu0 0.0
  %481 = vmatpush2.msra.mxu0 0.0
  %482 = vmatprep.subr.mxu0 0.0
  %483 = vmatpush2.msra.mxu0 0.0
  %484 = vmatprep.subr.mxu0 0.0
  %485 = vmatpush2.msra.mxu0 0.0
  %486 = vmatprep.subr.mxu0 0.0
  %487 = vmatpush2.msra.mxu0 0.0
  %488 = vmatprep.subr.mxu0 0.0
  %489 = vmatpush2.msra.mxu0 0.0
  %490 = vmatprep.subr.mxu0 0.0
  %491 = vmatpush2.msra.mxu0 0.0
  %492 = vmatprep.subr.mxu0 0.0
  %493 = vmatpush2.msra.mxu0 0.0
  %494 = vmatprep.subr.mxu0 0.0
  %495 = vmatpush2.msra.mxu0 0.0
  %496 = vmatprep.subr.mxu0 0.0
  %497 = vmatpush2.msra.mxu0 0.0
  %498 = vmatprep.subr.mxu0 0.0
  %499 = vmatpush2.msra.mxu0 0.0
  %500 = vmatprep.subr.mxu0 0.0
  %501 = vmatpush2.msra.mxu0 0.0
  %502 = vmatprep.subr.mxu0 0.0
  %503 = vmatpush2.msra.mxu0 0.0
  %504 = vmatprep.subr.mxu0 0.0
  %505 = vmatpush2.msra.mxu0 0.0
  %506 = vmatprep.subr.mxu0 0.0
  %507 = vmatpush2.msra.mxu0 0.0
  %508 = vmatprep.subr.mxu0 0.0
  %509 = vmatpush2.msra.mxu0 0.0
  %510 = vmatprep.subr.mxu0 0.0
  %511 = vmatpush2.msra.mxu0 0.0
  %512 = vmatprep.mubr.f32.mxu0 0.0
  %513 = vmatmul.mubr.f32.gmra.mxu0 %v439
  %v514 = vpop.f32.mrf.mxu0
  %v515 = vadd.f32 0.0, %v514
  %v516 = vpop.f32.mrf.mxu0
  %v517 = vadd.f32 0.0, %v516
  %518 = vdwg.mxu0
  %519 = vmatprep.subr.mxu0 %v438
  %520 = vmatpush1.msra.mxu0 %v437
  %521 = vmatprep.subr.mxu0 %v434
  %522 = vmatpush1.msra.mxu0 %v433
  %523 = vmatprep.subr.mxu0 %v430
  %524 = vmatpush1.msra.mxu0 %v429
  %525 = vmatprep.subr.mxu0 %v426
  %526 = vmatpush1.msra.mxu0 %v425
  %527 = vmatprep.subr.mxu0 %v422
  %528 = vmatpush1.msra.mxu0 %v421
  %529 = vmatprep.subr.mxu0 %v418
  %530 = vmatpush1.msra.mxu0 %v417
  %531 = vmatprep.subr.mxu0 %v414
  %532 = vmatpush1.msra.mxu0 %v413
  %533 = vmatprep.subr.mxu0 %v410
  %534 = vmatpush1.msra.mxu0 %v409
  %535 = vmatprep.subr.mxu0 %v406
  %536 = vmatpush1.msra.mxu0 %v405
  %537 = vmatprep.subr.mxu0 %v402
  %538 = vmatpush1.msra.mxu0 %v401
  %539 = vmatprep.subr.mxu0 %v398
  %540 = vmatpush1.msra.mxu0 %v397
  %541 = vmatprep.subr.mxu0 %v394
  %542 = vmatpush1.msra.mxu0 %v393
  %543 = vmatprep.subr.mxu0 %v390
  %544 = vmatpush1.msra.mxu0 %v389
  %545 = vmatprep.subr.mxu0 %v386
  %546 = vmatpush1.msra.mxu0 %v385
  %547 = vmatprep.subr.mxu0 %v382
  %548 = vmatpush1.msra.mxu0 %v381
  %549 = vmatprep.subr.mxu0 %v378
  %550 = vmatpush1.msra.mxu0 %v377
  %551 = vmatprep.subr.mxu0 0.0
  %552 = vmatpush2.msra.mxu0 0.0
  %553 = vmatprep.subr.mxu0 0.0
  %554 = vmatpush2.msra.mxu0 0.0
  %555 = vmatprep.subr.mxu0 0.0
  %556 = vmatpush2.msra.mxu0 0.0
  %557 = vmatprep.subr.mxu0 0.0
  %558 = vmatpush2.msra.mxu0 0.0
  %559 = vmatprep.subr.mxu0 0.0
  %560 = vmatpush2.msra.mxu0 0.0
  %561 = vmatprep.subr.mxu0 0.0
  %562 = vmatpush2.msra.mxu0 0.0
  %563 = vmatprep.subr.mxu0 0.0
  %564 = vmatpush2.msra.mxu0 0.0
  %565 = vmatprep.subr.mxu0 0.0
  %566 = vmatpush2.msra.mxu0 0.0
  %567 = vmatprep.subr.mxu0 0.0
  %568 = vmatpush2.msra.mxu0 0.0
  %569 = vmatprep.subr.mxu0 0.0
  %570 = vmatpush2.msra.mxu0 0.0
  %571 = vmatprep.subr.mxu0 0.0
  %572 = vmatpush2.msra.mxu0 0.0
  %573 = vmatprep.subr.mxu0 0.0
  %574 = vmatpush2.msra.mxu0 0.0
  %575 = vmatprep.subr.mxu0 0.0
  %576 = vmatpush2.msra.mxu0 0.0
  %577 = vmatprep.subr.mxu0 0.0
  %578 = vmatpush2.msra.mxu0 0.0
  %579 = vmatprep.subr.mxu0 0.0
  %580 = vmatpush2.msra.mxu0 0.0
  %581 = vmatprep.subr.mxu0 0.0
  %582 = vmatpush2.msra.mxu0 0.0
  %583 = vmatprep.mubr.f32.mxu0 0.0
  %584 = vmatmul.mubr.f32.gmra.mxu0 %v439
  %v585 = vpop.f32.mrf.mxu0
  %v586 = vadd.f32 0.0, %v585
  %v587 = vpop.f32.mrf.mxu0
  %v588 = vadd.f32 0.0, %v587
  %589 = vdwg.mxu0
  %v590 = vadd.f32 %v444, %v515
  %v591 = vadd.f32 %v445, %v517
  %v592 = vadd.f32 %v446, %v586
  %v593 = vadd.f32 %v447, %v588
  %v594 = vxor.u32 %v590, 2147483648
  %v595 = vmul.f32 %v594, 1.442695
  %v596 = vpow.pop %v595
  %v597 = vadd.f32 %v596, 1.0
  %v598 = vrcp.pop %v597
  %v599 = vmul.f32 1.0, %v598
  %v600 = vxor.u32 %v591, 2147483648
  %v601 = vmul.f32 %v600, 1.442695
  %v602 = vpow.pop %v601
  %v603 = vadd.f32 %v602, 1.0
  %v604 = vrcp.pop %v603
  %v605 = vmul.f32 1.0, %v604
  %v606 = vtanh.pop %v592
  %v607 = vxor.u32 %v593, 2147483648
  %v608 = vmul.f32 %v607, 1.442695
  %v609 = vpow.pop %v608
  %v610 = vadd.f32 %v609, 1.0
  %v611 = vrcp.pop %v610
  %v612 = vmul.f32 1.0, %v611
  %v613 = vmul.f32 %v605, %v440
  %v614 = vmul.f32 %v599, %v606
  %v615 = vadd.f32 %v613, %v614
  %v616 = vtanh.pop %v615
  %v617 = vmul.f32 %v612, %v616
  %s618 = smul.u32 1, 4
  %s619 = smul.addr %s618, 8
  %s620 = scalar_lea.vmem [#allocation2], %s619
  %v621 = vld [vmem:[%s620] sm:$0xff]
  %v622 = vld [vmem:[%s620 + $0x8] sm:$0xff]
  %v623 = vld [vmem:[%s620 + $0x10] sm:$0xff]
  %v624 = vld [vmem:[%s620 + $0x18] sm:$0xff]
  %625 = vmatprep.subr.mxu0 %v436
  %626 = vmatpush1.msra.mxu0 %v435
  %627 = vmatprep.subr.mxu0 %v432
  %628 = vmatpush1.msra.mxu0 %v431
  %629 = vmatprep.subr.mxu0 %v428
  %630 = vmatpush1.msra.mxu0 %v427
  %631 = vmatprep.subr.mxu0 %v424
  %632 = vmatpush1.msra.mxu0 %v423
  %633 = vmatprep.subr.mxu0 %v420
  %634 = vmatpush1.msra.mxu0 %v419
  %635 = vmatprep.subr.mxu0 %v416
  %636 = vmatpush1.msra.mxu0 %v415
  %637 = vmatprep.subr.mxu0 %v412
  %638 = vmatpush1.msra.mxu0 %v411
  %639 = vmatprep.subr.mxu0 %v408
  %640 = vmatpush1.msra.mxu0 %v407
  %641 = vmatprep.subr.mxu0 %v404
  %642 = vmatpush1.msra.mxu0 %v403
  %643 = vmatprep.subr.mxu0 %v400
  %644 = vmatpush1.msra.mxu0 %v399
  %645 = vmatprep.subr.mxu0 %v396
  %646 = vmatpush1.msra.mxu0 %v395
  %647 = vmatprep.subr.mxu0 %v392
  %648 = vmatpush1.msra.mxu0 %v391
  %649 = vmatprep.subr.mxu0 %v388
  %650 = vmatpush1.msra.mxu0 %v387
  %651 = vmatprep.subr.mxu0 %v384
  %652 = vmatpush1.msra.mxu0 %v383
  %653 = vmatprep.subr.mxu0 %v380
  %654 = vmatpush1.msra.mxu0 %v379
  %655 = vmatprep.subr.mxu0 %v376
  %656 = vmatpush1.msra.mxu0 %v375
  %657 = vmatprep.subr.mxu0 0.0
  %658 = vmatpush2.msra.mxu0 0.0
  %659 = vmatprep.subr.mxu0 0.0
  %660 = vmatpush2.msra.mxu0 0.0
  %661 = vmatprep.subr.mxu0 0.0
  %662 = vmatpush2.msra.mxu0 0.0
  %663 = vmatprep.subr.mxu0 0.0
  %664 = vmatpush2.msra.mxu0 0.0
  %665 = vmatprep.subr.mxu0 0.0
  %666 = vmatpush2.msra.mxu0 0.0
  %667 = vmatprep.subr.mxu0 0.0
  %668 = vmatpush2.msra.mxu0 0.0
  %669 = vmatprep.subr.mxu0 0.0
  %670 = vmatpush2.msra.mxu0 0.0
  %671 = vmatprep.subr.mxu0 0.0
  %672 = vmatpush2.msra.mxu0 0.0
  %673 = vmatprep.subr.mxu0 0.0
  %674 = vmatpush2.msra.mxu0 0.0
  %675 = vmatprep.subr.mxu0 0.0
  %676 = vmatpush2.msra.mxu0 0.0
  %677 = vmatprep.subr.mxu0 0.0
  %678 = vmatpush2.msra.mxu0 0.0
  %679 = vmatprep.subr.mxu0 0.0
  %680 = vmatpush2.msra.mxu0 0.0
  %681 = vmatprep.subr.mxu0 0.0
  %682 = vmatpush2.msra.mxu0 0.0
  %683 = vmatprep.subr.mxu0 0.0
  %684 = vmatpush2.msra.mxu0 0.0
  %685 = vmatprep.subr.mxu0 0.0
  %686 = vmatpush2.msra.mxu0 0.0
  %687 = vmatprep.subr.mxu0 0.0
  %688 = vmatpush2.msra.mxu0 0.0
  %689 = vmatprep.mubr.f32.mxu0 0.0
  %690 = vmatmul.mubr.f32.gmra.mxu0 %v617
  %v691 = vpop.f32.mrf.mxu0
  %v692 = vadd.f32 0.0, %v691
  %v693 = vpop.f32.mrf.mxu0
  %v694 = vadd.f32 0.0, %v693
  %695 = vdwg.mxu0
  %696 = vmatprep.subr.mxu0 %v438
  %697 = vmatpush1.msra.mxu0 %v437
  %698 = vmatprep.subr.mxu0 %v434
  %699 = vmatpush1.msra.mxu0 %v433
  %700 = vmatprep.subr.mxu0 %v430
  %701 = vmatpush1.msra.mxu0 %v429
  %702 = vmatprep.subr.mxu0 %v426
  %703 = vmatpush1.msra.mxu0 %v425
  %704 = vmatprep.subr.mxu0 %v422
  %705 = vmatpush1.msra.mxu0 %v421
  %706 = vmatprep.subr.mxu0 %v418
  %707 = vmatpush1.msra.mxu0 %v417
  %708 = vmatprep.subr.mxu0 %v414
  %709 = vmatpush1.msra.mxu0 %v413
  %710 = vmatprep.subr.mxu0 %v410
  %711 = vmatpush1.msra.mxu0 %v409
  %712 = vmatprep.subr.mxu0 %v406
  %713 = vmatpush1.msra.mxu0 %v405
  %714 = vmatprep.subr.mxu0 %v402
  %715 = vmatpush1.msra.mxu0 %v401
  %716 = vmatprep.subr.mxu0 %v398
  %717 = vmatpush1.msra.mxu0 %v397
  %718 = vmatprep.subr.mxu0 %v394
  %719 = vmatpush1.msra.mxu0 %v393
  %720 = vmatprep.subr.mxu0 %v390
  %721 = vmatpush1.msra.mxu0 %v389
  %722 = vmatprep.subr.mxu0 %v386
  %723 = vmatpush1.msra.mxu0 %v385
  %724 = vmatprep.subr.mxu0 %v382
  %725 = vmatpush1.msra.mxu0 %v381
  %726 = vmatprep.subr.mxu0 %v378
  %727 = vmatpush1.msra.mxu0 %v377
  %728 = vmatprep.subr.mxu0 0.0
  %729 = vmatpush2.msra.mxu0 0.0
  %730 = vmatprep.subr.mxu0 0.0
  %731 = vmatpush2.msra.mxu0 0.0
  %732 = vmatprep.subr.mxu0 0.0
  %733 = vmatpush2.msra.mxu0 0.0
  %734 = vmatprep.subr.mxu0 0.0
  %735 = vmatpush2.msra.mxu0 0.0
  %736 = vmatprep.subr.mxu0 0.0
  %737 = vmatpush2.msra.mxu0 0.0
  %738 = vmatprep.subr.mxu0 0.0
  %739 = vmatpush2.msra.mxu0 0.0
  %740 = vmatprep.subr.mxu0 0.0
  %741 = vmatpush2.msra.mxu0 0.0
  %742 = vmatprep.subr.mxu0 0.0
  %743 = vmatpush2.msra.mxu0 0.0
  %744 = vmatprep.subr.mxu0 0.0
  %745 = vmatpush2.msra.mxu0 0.0
  %746 = vmatprep.subr.mxu0 0.0
  %747 = vmatpush2.msra.mxu0 0.0
  %748 = vmatprep.subr.mxu0 0.0
  %749 = vmatpush2.msra.mxu0 0.0
  %750 = vmatprep.subr.mxu0 0.0
  %751 = vmatpush2.msra.mxu0 0.0
  %752 = vmatprep.subr.mxu0 0.0
  %753 = vmatpush2.msra.mxu0 0.0
  %754 = vmatprep.subr.mxu0 0.0
  %755 = vmatpush2.msra.mxu0 0.0
  %756 = vmatprep.subr.mxu0 0.0
  %757 = vmatpush2.msra.mxu0 0.0
  %758 = vmatprep.subr.mxu0 0.0
  %759 = vmatpush2.msra.mxu0 0.0
  %760 = vmatprep.mubr.f32.mxu0 0.0
  %761 = vmatmul.mubr.f32.gmra.mxu0 %v617
  %v762 = vpop.f32.mrf.mxu0
  %v763 = vadd.f32 0.0, %v762
  %v764 = vpop.f32.mrf.mxu0
  %v765 = vadd.f32 0.0, %v764
  %766 = vdwg.mxu0
  %v767 = vadd.f32 %v621, %v692
  %v768 = vadd.f32 %v622, %v694
  %v769 = vadd.f32 %v623, %v763
  %v770 = vadd.f32 %v624, %v765
  %v771 = vxor.u32 %v767, 2147483648
  %v772 = vmul.f32 %v771, 1.442695
  %v773 = vpow.pop %v772
  %v774 = vadd.f32 %v773, 1.0
  %v775 = vrcp.pop %v774
  %v776 = vmul.f32 1.0, %v775
  %v777 = vxor.u32 %v768, 2147483648
  %v778 = vmul.f32 %v777, 1.442695
  %v779 = vpow.pop %v778
  %v780 = vadd.f32 %v779, 1.0
  %v781 = vrcp.pop %v780
  %v782 = vmul.f32 1.0, %v781
  %v783 = vtanh.pop %v769
  %v784 = vxor.u32 %v770, 2147483648
  %v785 = vmul.f32 %v784, 1.442695
  %v786 = vpow.pop %v785
  %v787 = vadd.f32 %v786, 1.0
  %v788 = vrcp.pop %v787
  %v789 = vmul.f32 1.0, %v788
  %v790 = vmul.f32 %v782, %v615
  %v791 = vmul.f32 %v776, %v783
  %v792 = vadd.f32 %v790, %v791
  %v793 = vtanh.pop %v792
  %v794 = vmul.f32 %v789, %v793
  %s795 = smul.u32 2, 4
  %s796 = smul.addr %s795, 8
  %s797 = scalar_lea.vmem [#allocation2], %s796
  %v798 = vld [vmem:[%s797] sm:$0xff]
  %v799 = vld [vmem:[%s797 + $0x8] sm:$0xff]
  %v800 = vld [vmem:[%s797 + $0x10] sm:$0xff]
  %v801 = vld [vmem:[%s797 + $0x18] sm:$0xff]
  %802 = vmatprep.subr.mxu0 %v436
  %803 = vmatpush1.msra.mxu0 %v435
  %804 = vmatprep.subr.mxu0 %v432
  %805 = vmatpush1.msra.mxu0 %v431
  %806 = vmatprep.subr.mxu0 %v428
  %807 = vmatpush1.msra.mxu0 %v427
  %808 = vmatprep.subr.mxu0 %v424
  %809 = vmatpush1.msra.mxu0 %v423
  %810 = vmatprep.subr.mxu0 %v420
  %811 = vmatpush1.msra.mxu0 %v419
  %812 = vmatprep.subr.mxu0 %v416
  %813 = vmatpush1.msra.mxu0 %v415
  %814 = vmatprep.subr.mxu0 %v412
  %815 = vmatpush1.msra.mxu0 %v411
  %816 = vmatprep.subr.mxu0 %v408
  %817 = vmatpush1.msra.mxu0 %v407
  %818 = vmatprep.subr.mxu0 %v404
  %819 = vmatpush1.msra.mxu0 %v403
  %820 = vmatprep.subr.mxu0 %v400
  %821 = vmatpush1.msra.mxu0 %v399
  %822 = vmatprep.subr.mxu0 %v396
  %823 = vmatpush1.msra.mxu0 %v395
  %824 = vmatprep.subr.mxu0 %v392
  %825 = vmatpush1.msra.mxu0 %v391
  %826 = vmatprep.subr.mxu0 %v388
  %827 = vmatpush1.msra.mxu0 %v387
  %828 = vmatprep.subr.mxu0 %v384
  %829 = vmatpush1.msra.mxu0 %v383
  %830 = vmatprep.subr.mxu0 %v380
  %831 = vmatpush1.msra.mxu0 %v379
  %832 = vmatprep.subr.mxu0 %v376
  %833 = vmatpush1.msra.mxu0 %v375
  %834 = vmatprep.subr.mxu0 0.0
  %835 = vmatpush2.msra.mxu0 0.0
  %836 = vmatprep.subr.mxu0 0.0
  %837 = vmatpush2.msra.mxu0 0.0
  %838 = vmatprep.subr.mxu0 0.0
  %839 = vmatpush2.msra.mxu0 0.0
  %840 = vmatprep.subr.mxu0 0.0
  %841 = vmatpush2.msra.mxu0 0.0
  %842 = vmatprep.subr.mxu0 0.0
  %843 = vmatpush2.msra.mxu0 0.0
  %844 = vmatprep.subr.mxu0 0.0
  %845 = vmatpush2.msra.mxu0 0.0
  %846 = vmatprep.subr.mxu0 0.0
  %847 = vmatpush2.msra.mxu0 0.0
  %848 = vmatprep.subr.mxu0 0.0
  %849 = vmatpush2.msra.mxu0 0.0
  %850 = vmatprep.subr.mxu0 0.0
  %851 = vmatpush2.msra.mxu0 0.0
  %852 = vmatprep.subr.mxu0 0.0
  %853 = vmatpush2.msra.mxu0 0.0
  %854 = vmatprep.subr.mxu0 0.0
  %855 = vmatpush2.msra.mxu0 0.0
  %856 = vmatprep.subr.mxu0 0.0
  %857 = vmatpush2.msra.mxu0 0.0
  %858 = vmatprep.subr.mxu0 0.0
  %859 = vmatpush2.msra.mxu0 0.0
  %860 = vmatprep.subr.mxu0 0.0
  %861 = vmatpush2.msra.mxu0 0.0
  %862 = vmatprep.subr.mxu0 0.0
  %863 = vmatpush2.msra.mxu0 0.0
  %864 = vmatprep.subr.mxu0 0.0
  %865 = vmatpush2.msra.mxu0 0.0
  %866 = vmatprep.mubr.f32.mxu0 0.0
  %867 = vmatmul.mubr.f32.gmra.mxu0 %v794
  %v868 = vpop.f32.mrf.mxu0
  %v869 = vadd.f32 0.0, %v868
  %v870 = vpop.f32.mrf.mxu0
  %v871 = vadd.f32 0.0, %v870
  %872 = vdwg.mxu0
  %873 = vmatprep.subr.mxu0 %v438
  %874 = vmatpush1.msra.mxu0 %v437
  %875 = vmatprep.subr.mxu0 %v434
  %876 = vmatpush1.msra.mxu0 %v433
  %877 = vmatprep.subr.mxu0 %v430
  %878 = vmatpush1.msra.mxu0 %v429
  %879 = vmatprep.subr.mxu0 %v426
  %880 = vmatpush1.msra.mxu0 %v425
  %881 = vmatprep.subr.mxu0 %v422
  %882 = vmatpush1.msra.mxu0 %v421
  %883 = vmatprep.subr.mxu0 %v418
  %884 = vmatpush1.msra.mxu0 %v417
  %885 = vmatprep.subr.mxu0 %v414
  %886 = vmatpush1.msra.mxu0 %v413
  %887 = vmatprep.subr.mxu0 %v410
  %888 = vmatpush1.msra.mxu0 %v409
  %889 = vmatprep.subr.mxu0 %v406
  %890 = vmatpush1.msra.mxu0 %v405
  %891 = vmatprep.subr.mxu0 %v402
  %892 = vmatpush1.msra.mxu0 %v401
  %893 = vmatprep.subr.mxu0 %v398
  %894 = vmatpush1.msra.mxu0 %v397
  %895 = vmatprep.subr.mxu0 %v394
  %896 = vmatpush1.msra.mxu0 %v393
  %897 = vmatprep.subr.mxu0 %v390
  %898 = vmatpush1.msra.mxu0 %v389
  %899 = vmatprep.subr.mxu0 %v386
  %900 = vmatpush1.msra.mxu0 %v385
  %901 = vmatprep.subr.mxu0 %v382
  %902 = vmatpush1.msra.mxu0 %v381
  %903 = vmatprep.subr.mxu0 %v378
  %904 = vmatpush1.msra.mxu0 %v377
  %905 = vmatprep.subr.mxu0 0.0
  %906 = vmatpush2.msra.mxu0 0.0
  %907 = vmatprep.subr.mxu0 0.0
  %908 = vmatpush2.msra.mxu0 0.0
  %909 = vmatprep.subr.mxu0 0.0
  %910 = vmatpush2.msra.mxu0 0.0
  %911 = vmatprep.subr.mxu0 0.0
  %912 = vmatpush2.msra.mxu0 0.0
  %913 = vmatprep.subr.mxu0 0.0
  %914 = vmatpush2.msra.mxu0 0.0
  %915 = vmatprep.subr.mxu0 0.0
  %916 = vmatpush2.msra.mxu0 0.0
  %917 = vmatprep.subr.mxu0 0.0
  %918 = vmatpush2.msra.mxu0 0.0
  %919 = vmatprep.subr.mxu0 0.0
  %920 = vmatpush2.msra.mxu0 0.0
  %921 = vmatprep.subr.mxu0 0.0
  %922 = vmatpush2.msra.mxu0 0.0
  %923 = vmatprep.subr.mxu0 0.0
  %924 = vmatpush2.msra.mxu0 0.0
  %925 = vmatprep.subr.mxu0 0.0
  %926 = vmatpush2.msra.mxu0 0.0
  %927 = vmatprep.subr.mxu0 0.0
  %928 = vmatpush2.msra.mxu0 0.0
  %929 = vmatprep.subr.mxu0 0.0
  %930 = vmatpush2.msra.mxu0 0.0
  %931 = vmatprep.subr.mxu0 0.0
  %932 = vmatpush2.msra.mxu0 0.0
  %933 = vmatprep.subr.mxu0 0.0
  %934 = vmatpush2.msra.mxu0 0.0
  %935 = vmatprep.subr.mxu0 0.0
  %936 = vmatpush2.msra.mxu0 0.0
  %937 = vmatprep.mubr.f32.mxu0 0.0
  %938 = vmatmul.mubr.f32.gmra.mxu0 %v794
  %v939 = vpop.f32.mrf.mxu0
  %v940 = vadd.f32 0.0, %v939
  %v941 = vpop.f32.mrf.mxu0
  %v942 = vadd.f32 0.0, %v941
  %943 = vdwg.mxu0
  %v944 = vadd.f32 %v798, %v869
  %v945 = vadd.f32 %v799, %v871
  %v946 = vadd.f32 %v800, %v940
  %v947 = vadd.f32 %v801, %v942
  %v948 = vxor.u32 %v944, 2147483648
  %v949 = vmul.f32 %v948, 1.442695
  %v950 = vpow.pop %v949
  %v951 = vadd.f32 %v950, 1.0
  %v952 = vrcp.pop %v951
  %v953 = vmul.f32 1.0, %v952
  %v954 = vxor.u32 %v945, 2147483648
  %v955 = vmul.f32 %v954, 1.442695
  %v956 = vpow.pop %v955
  %v957 = vadd.f32 %v956, 1.0
  %v958 = vrcp.pop %v957
  %v959 = vmul.f32 1.0, %v958
  %v960 = vtanh.pop %v946
  %v961 = vxor.u32 %v947, 2147483648
  %v962 = vmul.f32 %v961, 1.442695
  %v963 = vpow.pop %v962
  %v964 = vadd.f32 %v963, 1.0
  %v965 = vrcp.pop %v964
  %v966 = vmul.f32 1.0, %v965
  %v967 = vmul.f32 %v959, %v792
  %v968 = vmul.f32 %v953, %v960
  %v969 = vadd.f32 %v967, %v968
  %v970 = vtanh.pop %v969
  %v971 = vmul.f32 %v966, %v970
  %s972 = smul.u32 3, 4
  %s973 = smul.addr %s972, 8
  %s974 = scalar_lea.vmem [#allocation2], %s973
  %v975 = vld [vmem:[%s974] sm:$0xff]
  %v976 = vld [vmem:[%s974 + $0x8] sm:$0xff]
  %v977 = vld [vmem:[%s974 + $0x10] sm:$0xff]
  %v978 = vld [vmem:[%s974 + $0x18] sm:$0xff]
  %979 = vmatprep.subr.mxu0 %v436
  %980 = vmatpush1.msra.mxu0 %v435
  %981 = vmatprep.subr.mxu0 %v432
  %982 = vmatpush1.msra.mxu0 %v431
  %983 = vmatprep.subr.mxu0 %v428
  %984 = vmatpush1.msra.mxu0 %v427
  %985 = vmatprep.subr.mxu0 %v424
  %986 = vmatpush1.msra.mxu0 %v423
  %987 = vmatprep.subr.mxu0 %v420
  %988 = vmatpush1.msra.mxu0 %v419
  %989 = vmatprep.subr.mxu0 %v416
  %990 = vmatpush1.msra.mxu0 %v415
  %991 = vmatprep.subr.mxu0 %v412
  %992 = vmatpush1.msra.mxu0 %v411
  %993 = vmatprep.subr.mxu0 %v408
  %994 = vmatpush1.msra.mxu0 %v407
  %995 = vmatprep.subr.mxu0 %v404
  %996 = vmatpush1.msra.mxu0 %v403
  %997 = vmatprep.subr.mxu0 %v400
  %998 = vmatpush1.msra.mxu0 %v399
  %999 = vmatprep.subr.mxu0 %v396
  %1000 = vmatpush1.msra.mxu0 %v395
  %1001 = vmatprep.subr.mxu0 %v392
  %1002 = vmatpush1.msra.mxu0 %v391
  %1003 = vmatprep.subr.mxu0 %v388
  %1004 = vmatpush1.msra.mxu0 %v387
  %1005 = vmatprep.subr.mxu0 %v384
  %1006 = vmatpush1.msra.mxu0 %v383
  %1007 = vmatprep.subr.mxu0 %v380
  %1008 = vmatpush1.msra.mxu0 %v379
  %1009 = vmatprep.subr.mxu0 %v376
  %1010 = vmatpush1.msra.mxu0 %v375
  %1011 = vmatprep.subr.mxu0 0.0
  %1012 = vmatpush2.msra.mxu0 0.0
  %1013 = vmatprep.subr.mxu0 0.0
  %1014 = vmatpush2.msra.mxu0 0.0
  %1015 = vmatprep.subr.mxu0 0.0
  %1016 = vmatpush2.msra.mxu0 0.0
  %1017 = vmatprep.subr.mxu0 0.0
  %1018 = vmatpush2.msra.mxu0 0.0
  %1019 = vmatprep.subr.mxu0 0.0
  %1020 = vmatpush2.msra.mxu0 0.0
  %1021 = vmatprep.subr.mxu0 0.0
  %1022 = vmatpush2.msra.mxu0 0.0
  %1023 = vmatprep.subr.mxu0 0.0
  %1024 = vmatpush2.msra.mxu0 0.0
  %1025 = vmatprep.subr.mxu0 0.0
  %1026 = vmatpush2.msra.mxu0 0.0
  %1027 = vmatprep.subr.mxu0 0.0
  %1028 = vmatpush2.msra.mxu0 0.0
  %1029 = vmatprep.subr.mxu0 0.0
  %1030 = vmatpush2.msra.mxu0 0.0
  %1031 = vmatprep.subr.mxu0 0.0
  %1032 = vmatpush2.msra.mxu0 0.0
  %1033 = vmatprep.subr.mxu0 0.0
  %1034 = vmatpush2.msra.mxu0 0.0
  %1035 = vmatprep.subr.mxu0 0.0
  %1036 = vmatpush2.msra.mxu0 0.0
  %1037 = vmatprep.subr.mxu0 0.0
  %1038 = vmatpush2.msra.mxu0 0.0
  %1039 = vmatprep.subr.mxu0 0.0
  %1040 = vmatpush2.msra.mxu0 0.0
  %1041 = vmatprep.subr.mxu0 0.0
  %1042 = vmatpush2.msra.mxu0 0.0
  %1043 = vmatprep.mubr.f32.mxu0 0.0
  %1044 = vmatmul.mubr.f32.gmra.mxu0 %v971
  %v1045 = vpop.f32.mrf.mxu0
  %v1046 = vadd.f32 0.0, %v1045
  %v1047 = vpop.f32.mrf.mxu0
  %v1048 = vadd.f32 0.0, %v1047
  %1049 = vdwg.mxu0
  %1050 = vmatprep.subr.mxu0 %v438
  %1051 = vmatpush1.msra.mxu0 %v437
  %1052 = vmatprep.subr.mxu0 %v434
  %1053 = vmatpush1.msra.mxu0 %v433
  %1054 = vmatprep.subr.mxu0 %v430
  %1055 = vmatpush1.msra.mxu0 %v429
  %1056 = vmatprep.subr.mxu0 %v426
  %1057 = vmatpush1.msra.mxu0 %v425
  %1058 = vmatprep.subr.mxu0 %v422
  %1059 = vmatpush1.msra.mxu0 %v421
  %1060 = vmatprep.subr.mxu0 %v418
  %1061 = vmatpush1.msra.mxu0 %v417
  %1062 = vmatprep.subr.mxu0 %v414
  %1063 = vmatpush1.msra.mxu0 %v413
  %1064 = vmatprep.subr.mxu0 %v410
  %1065 = vmatpush1.msra.mxu0 %v409
  %1066 = vmatprep.subr.mxu0 %v406
  %1067 = vmatpush1.msra.mxu0 %v405
  %1068 = vmatprep.subr.mxu0 %v402
  %1069 = vmatpush1.msra.mxu0 %v401
  %1070 = vmatprep.subr.mxu0 %v398
  %1071 = vmatpush1.msra.mxu0 %v397
  %1072 = vmatprep.subr.mxu0 %v394
  %1073 = vmatpush1.msra.mxu0 %v393
  %1074 = vmatprep.subr.mxu0 %v390
  %1075 = vmatpush1.msra.mxu0 %v389
  %1076 = vmatprep.subr.mxu0 %v386
  %1077 = vmatpush1.msra.mxu0 %v385
  %1078 = vmatprep.subr.mxu0 %v382
  %1079 = vmatpush1.msra.mxu0 %v381
  %1080 = vmatprep.subr.mxu0 %v378
  %1081 = vmatpush1.msra.mxu0 %v377
  %1082 = vmatprep.subr.mxu0 0.0
  %1083 = vmatpush2.msra.mxu0 0.0
  %1084 = vmatprep.subr.mxu0 0.0
  %1085 = vmatpush2.msra.mxu0 0.0
  %1086 = vmatprep.subr.mxu0 0.0
  %1087 = vmatpush2.msra.mxu0 0.0
  %1088 = vmatprep.subr.mxu0 0.0
  %1089 = vmatpush2.msra.mxu0 0.0
  %1090 = vmatprep.subr.mxu0 0.0
  %1091 = vmatpush2.msra.mxu0 0.0
  %1092 = vmatprep.subr.mxu0 0.0
  %1093 = vmatpush2.msra.mxu0 0.0
  %1094 = vmatprep.subr.mxu0 0.0
  %1095 = vmatpush2.msra.mxu0 0.0
  %1096 = vmatprep.subr.mxu0 0.0
  %1097 = vmatpush2.msra.mxu0 0.0
  %1098 = vmatprep.subr.mxu0 0.0
  %1099 = vmatpush2.msra.mxu0 0.0
  %1100 = vmatprep.subr.mxu0 0.0
  %1101 = vmatpush2.msra.mxu0 0.0
  %1102 = vmatprep.subr.mxu0 0.0
  %1103 = vmatpush2.msra.mxu0 0.0
  %1104 = vmatprep.subr.mxu0 0.0
  %1105 = vmatpush2.msra.mxu0 0.0
  %1106 = vmatprep.subr.mxu0 0.0
  %1107 = vmatpush2.msra.mxu0 0.0
  %1108 = vmatprep.subr.mxu0 0.0
  %1109 = vmatpush2.msra.mxu0 0.0
  %1110 = vmatprep.subr.mxu0 0.0
  %1111 = vmatpush2.msra.mxu0 0.0
  %1112 = vmatprep.subr.mxu0 0.0
  %1113 = vmatpush2.msra.mxu0 0.0
  %1114 = vmatprep.mubr.f32.mxu0 0.0
  %1115 = vmatmul.mubr.f32.gmra.mxu0 %v971
  %v1116 = vpop.f32.mrf.mxu0
  %v1117 = vadd.f32 0.0, %v1116
  %v1118 = vpop.f32.mrf.mxu0
  %v1119 = vadd.f32 0.0, %v1118
  %1120 = vdwg.mxu0
  %v1121 = vadd.f32 %v975, %v1046
  %v1122 = vadd.f32 %v976, %v1048
  %v1123 = vadd.f32 %v977, %v1117
  %v1124 = vadd.f32 %v978, %v1119
  %v1125 = vxor.u32 %v1121, 2147483648
  %v1126 = vmul.f32 %v1125, 1.442695
  %v1127 = vpow.pop %v1126
  %v1128 = vadd.f32 %v1127, 1.0
  %v1129 = vrcp.pop %v1128
  %v1130 = vmul.f32 1.0, %v1129
  %v1131 = vxor.u32 %v1122, 2147483648
  %v1132 = vmul.f32 %v1131, 1.442695
  %v1133 = vpow.pop %v1132
  %v1134 = vadd.f32 %v1133, 1.0
  %v1135 = vrcp.pop %v1134
  %v1136 = vmul.f32 1.0, %v1135
  %v1137 = vtanh.pop %v1123
  %v1138 = vxor.u32 %v1124, 2147483648
  %v1139 = vmul.f32 %v1138, 1.442695
  %v1140 = vpow.pop %v1139
  %v1141 = vadd.f32 %v1140, 1.0
  %v1142 = vrcp.pop %v1141
  %v1143 = vmul.f32 1.0, %v1142
  %v1144 = vmul.f32 %v1136, %v969
  %v1145 = vmul.f32 %v1130, %v1137
  %v1146 = vadd.f32 %v1144, %v1145
  %v1147 = vtanh.pop %v1146
  %v1148 = vmul.f32 %v1143, %v1147
  %s1149 = smul.u32 4, 4
  %s1150 = smul.addr %s1149, 8
  %s1151 = scalar_lea.vmem [#allocation2], %s1150
  %v1152 = vld [vmem:[%s1151] sm:$0xff]
  %v1153 = vld [vmem:[%s1151 + $0x8] sm:$0xff]
  %v1154 = vld [vmem:[%s1151 + $0x10] sm:$0xff]
  %v1155 = vld [vmem:[%s1151 + $0x18] sm:$0xff]
  %1156 = vmatprep.subr.mxu0 %v436
  %1157 = vmatpush1.msra.mxu0 %v435
  %1158 = vmatprep.subr.mxu0 %v432
  %1159 = vmatpush1.msra.mxu0 %v431
  %1160 = vmatprep.subr.mxu0 %v428
  %1161 = vmatpush1.msra.mxu0 %v427
  %1162 = vmatprep.subr.mxu0 %v424
  %1163 = vmatpush1.msra.mxu0 %v423
  %1164 = vmatprep.subr.mxu0 %v420
  %1165 = vmatpush1.msra.mxu0 %v419
  %1166 = vmatprep.subr.mxu0 %v416
  %1167 = vmatpush1.msra.mxu0 %v415
  %1168 = vmatprep.subr.mxu0 %v412
  %1169 = vmatpush1.msra.mxu0 %v411
  %1170 = vmatprep.subr.mxu0 %v408
  %1171 = vmatpush1.msra.mxu0 %v407
  %1172 = vmatprep.subr.mxu0 %v404
  %1173 = vmatpush1.msra.mxu0 %v403
  %1174 = vmatprep.subr.mxu0 %v400
  %1175 = vmatpush1.msra.mxu0 %v399
  %1176 = vmatprep.subr.mxu0 %v396
  %1177 = vmatpush1.msra.mxu0 %v395
  %1178 = vmatprep.subr.mxu0 %v392
  %1179 = vmatpush1.msra.mxu0 %v391
  %1180 = vmatprep.subr.mxu0 %v388
  %1181 = vmatpush1.msra.mxu0 %v387
  %1182 = vmatprep.subr.mxu0 %v384
  %1183 = vmatpush1.msra.mxu0 %v383
  %1184 = vmatprep.subr.mxu0 %v380
  %1185 = vmatpush1.msra.mxu0 %v379
  %1186 = vmatprep.subr.mxu0 %v376
  %1187 = vmatpush1.msra.mxu0 %v375
  %1188 = vmatprep.subr.mxu0 0.0
  %1189 = vmatpush2.msra.mxu0 0.0
  %1190 = vmatprep.subr.mxu0 0.0
  %1191 = vmatpush2.msra.mxu0 0.0
  %1192 = vmatprep.subr.mxu0 0.0
  %1193 = vmatpush2.msra.mxu0 0.0
  %1194 = vmatprep.subr.mxu0 0.0
  %1195 = vmatpush2.msra.mxu0 0.0
  %1196 = vmatprep.subr.mxu0 0.0
  %1197 = vmatpush2.msra.mxu0 0.0
  %1198 = vmatprep.subr.mxu0 0.0
  %1199 = vmatpush2.msra.mxu0 0.0
  %1200 = vmatprep.subr.mxu0 0.0
  %1201 = vmatpush2.msra.mxu0 0.0
  %1202 = vmatprep.subr.mxu0 0.0
  %1203 = vmatpush2.msra.mxu0 0.0
  %1204 = vmatprep.subr.mxu0 0.0
  %1205 = vmatpush2.msra.mxu0 0.0
  %1206 = vmatprep.subr.mxu0 0.0
  %1207 = vmatpush2.msra.mxu0 0.0
  %1208 = vmatprep.subr.mxu0 0.0
  %1209 = vmatpush2.msra.mxu0 0.0
  %1210 = vmatprep.subr.mxu0 0.0
  %1211 = vmatpush2.msra.mxu0 0.0
  %1212 = vmatprep.subr.mxu0 0.0
  %1213 = vmatpush2.msra.mxu0 0.0
  %1214 = vmatprep.subr.mxu0 0.0
  %1215 = vmatpush2.msra.mxu0 0.0
  %1216 = vmatprep.subr.mxu0 0.0
  %1217 = vmatpush2.msra.mxu0 0.0
  %1218 = vmatprep.subr.mxu0 0.0
  %1219 = vmatpush2.msra.mxu0 0.0
  %1220 = vmatprep.mubr.f32.mxu0 0.0
  %1221 = vmatmul.mubr.f32.gmra.mxu0 %v1148
  %v1222 = vpop.f32.mrf.mxu0
  %v1223 = vadd.f32 0.0, %v1222
  %v1224 = vpop.f32.mrf.mxu0
  %v1225 = vadd.f32 0.0, %v1224
  %1226 = vdwg.mxu0
  %1227 = vmatprep.subr.mxu0 %v438
  %1228 = vmatpush1.msra.mxu0 %v437
  %1229 = vmatprep.subr.mxu0 %v434
  %1230 = vmatpush1.msra.mxu0 %v433
  %1231 = vmatprep.subr.mxu0 %v430
  %1232 = vmatpush1.msra.mxu0 %v429
  %1233 = vmatprep.subr.mxu0 %v426
  %1234 = vmatpush1.msra.mxu0 %v425
  %1235 = vmatprep.subr.mxu0 %v422
  %1236 = vmatpush1.msra.mxu0 %v421
  %1237 = vmatprep.subr.mxu0 %v418
  %1238 = vmatpush1.msra.mxu0 %v417
  %1239 = vmatprep.subr.mxu0 %v414
  %1240 = vmatpush1.msra.mxu0 %v413
  %1241 = vmatprep.subr.mxu0 %v410
  %1242 = vmatpush1.msra.mxu0 %v409
  %1243 = vmatprep.subr.mxu0 %v406
  %1244 = vmatpush1.msra.mxu0 %v405
  %1245 = vmatprep.subr.mxu0 %v402
  %1246 = vmatpush1.msra.mxu0 %v401
  %1247 = vmatprep.subr.mxu0 %v398
  %1248 = vmatpush1.msra.mxu0 %v397
  %1249 = vmatprep.subr.mxu0 %v394
  %1250 = vmatpush1.msra.mxu0 %v393
  %1251 = vmatprep.subr.mxu0 %v390
  %1252 = vmatpush1.msra.mxu0 %v389
  %1253 = vmatprep.subr.mxu0 %v386
  %1254 = vmatpush1.msra.mxu0 %v385
  %1255 = vmatprep.subr.mxu0 %v382
  %1256 = vmatpush1.msra.mxu0 %v381
  %1257 = vmatprep.subr.mxu0 %v378
  %1258 = vmatpush1.msra.mxu0 %v377
  %1259 = vmatprep.subr.mxu0 0.0
  %1260 = vmatpush2.msra.mxu0 0.0
  %1261 = vmatprep.subr.mxu0 0.0
  %1262 = vmatpush2.msra.mxu0 0.0
  %1263 = vmatprep.subr.mxu0 0.0
  %1264 = vmatpush2.msra.mxu0 0.0
  %1265 = vmatprep.subr.mxu0 0.0
  %1266 = vmatpush2.msra.mxu0 0.0
  %1267 = vmatprep.subr.mxu0 0.0
  %1268 = vmatpush2.msra.mxu0 0.0
  %1269 = vmatprep.subr.mxu0 0.0
  %1270 = vmatpush2.msra.mxu0 0.0
  %1271 = vmatprep.subr.mxu0 0.0
  %1272 = vmatpush2.msra.mxu0 0.0
  %1273 = vmatprep.subr.mxu0 0.0
  %1274 = vmatpush2.msra.mxu0 0.0
  %1275 = vmatprep.subr.mxu0 0.0
  %1276 = vmatpush2.msra.mxu0 0.0
  %1277 = vmatprep.subr.mxu0 0.0
  %1278 = vmatpush2.msra.mxu0 0.0
  %1279 = vmatprep.subr.mxu0 0.0
  %1280 = vmatpush2.msra.mxu0 0.0
  %1281 = vmatprep.subr.mxu0 0.0
  %1282 = vmatpush2.msra.mxu0 0.0
  %1283 = vmatprep.subr.mxu0 0.0
  %1284 = vmatpush2.msra.mxu0 0.0
  %1285 = vmatprep.subr.mxu0 0.0
  %1286 = vmatpush2.msra.mxu0 0.0
  %1287 = vmatprep.subr.mxu0 0.0
  %1288 = vmatpush2.msra.mxu0 0.0
  %1289 = vmatprep.subr.mxu0 0.0
  %1290 = vmatpush2.msra.mxu0 0.0
  %1291 = vmatprep.mubr.f32.mxu0 0.0
  %1292 = vmatmul.mubr.f32.gmra.mxu0 %v1148
  %v1293 = vpop.f32.mrf.mxu0
  %v1294 = vadd.f32 0.0, %v1293
  %v1295 = vpop.f32.mrf.mxu0
  %v1296 = vadd.f32 0.0, %v1295
  %1297 = vdwg.mxu0
  %v1298 = vadd.f32 %v1152, %v1223
  %v1299 = vadd.f32 %v1153, %v1225
  %v1300 = vadd.f32 %v1154, %v1294
  %v1301 = vadd.f32 %v1155, %v1296
  %v1302 = vxor.u32 %v1298, 2147483648
  %v1303 = vmul.f32 %v1302, 1.442695
  %v1304 = vpow.pop %v1303
  %v1305 = vadd.f32 %v1304, 1.0
  %v1306 = vrcp.pop %v1305
  %v1307 = vmul.f32 1.0, %v1306
  %v1308 = vxor.u32 %v1299, 2147483648
  %v1309 = vmul.f32 %v1308, 1.442695
  %v1310 = vpow.pop %v1309
  %v1311 = vadd.f32 %v1310, 1.0
  %v1312 = vrcp.pop %v1311
  %v1313 = vmul.f32 1.0, %v1312
  %v1314 = vtanh.pop %v1300
  %v1315 = vxor.u32 %v1301, 2147483648
  %v1316 = vmul.f32 %v1315, 1.442695
  %v1317 = vpow.pop %v1316
  %v1318 = vadd.f32 %v1317, 1.0
  %v1319 = vrcp.pop %v1318
  %v1320 = vmul.f32 1.0, %v1319
  %v1321 = vmul.f32 %v1313, %v1146
  %v1322 = vmul.f32 %v1307, %v1314
  %v1323 = vadd.f32 %v1321, %v1322
  %v1324 = vtanh.pop %v1323
  %v1325 = vmul.f32 %v1320, %v1324
  %s1326 = smul.u32 5, 4
  %s1327 = smul.addr %s1326, 8
  %s1328 = scalar_lea.vmem [#allocation2], %s1327
  %v1329 = vld [vmem:[%s1328] sm:$0xff]
  %v1330 = vld [vmem:[%s1328 + $0x8] sm:$0xff]
  %v1331 = vld [vmem:[%s1328 + $0x10] sm:$0xff]
  %v1332 = vld [vmem:[%s1328 + $0x18] sm:$0xff]
  %1333 = vmatprep.subr.mxu0 %v436
  %1334 = vmatpush1.msra.mxu0 %v435
  %1335 = vmatprep.subr.mxu0 %v432
  %1336 = vmatpush1.msra.mxu0 %v431
  %1337 = vmatprep.subr.mxu0 %v428
  %1338 = vmatpush1.msra.mxu0 %v427
  %1339 = vmatprep.subr.mxu0 %v424
  %1340 = vmatpush1.msra.mxu0 %v423
  %1341 = vmatprep.subr.mxu0 %v420
  %1342 = vmatpush1.msra.mxu0 %v419
  %1343 = vmatprep.subr.mxu0 %v416
  %1344 = vmatpush1.msra.mxu0 %v415
  %1345 = vmatprep.subr.mxu0 %v412
  %1346 = vmatpush1.msra.mxu0 %v411
  %1347 = vmatprep.subr.mxu0 %v408
  %1348 = vmatpush1.msra.mxu0 %v407
  %1349 = vmatprep.subr.mxu0 %v404
  %1350 = vmatpush1.msra.mxu0 %v403
  %1351 = vmatprep.subr.mxu0 %v400
  %1352 = vmatpush1.msra.mxu0 %v399
  %1353 = vmatprep.subr.mxu0 %v396
  %1354 = vmatpush1.msra.mxu0 %v395
  %1355 = vmatprep.subr.mxu0 %v392
  %1356 = vmatpush1.msra.mxu0 %v391
  %1357 = vmatprep.subr.mxu0 %v388
  %1358 = vmatpush1.msra.mxu0 %v387
  %1359 = vmatprep.subr.mxu0 %v384
  %1360 = vmatpush1.msra.mxu0 %v383
  %1361 = vmatprep.subr.mxu0 %v380
  %1362 = vmatpush1.msra.mxu0 %v379
  %1363 = vmatprep.subr.mxu0 %v376
  %1364 = vmatpush1.msra.mxu0 %v375
  %1365 = vmatprep.subr.mxu0 0.0
  %1366 = vmatpush2.msra.mxu0 0.0
  %1367 = vmatprep.subr.mxu0 0.0
  %1368 = vmatpush2.msra.mxu0 0.0
  %1369 = vmatprep.subr.mxu0 0.0
  %1370 = vmatpush2.msra.mxu0 0.0
  %1371 = vmatprep.subr.mxu0 0.0
  %1372 = vmatpush2.msra.mxu0 0.0
  %1373 = vmatprep.subr.mxu0 0.0
  %1374 = vmatpush2.msra.mxu0 0.0
  %1375 = vmatprep.subr.mxu0 0.0
  %1376 = vmatpush2.msra.mxu0 0.0
  %1377 = vmatprep.subr.mxu0 0.0
  %1378 = vmatpush2.msra.mxu0 0.0
  %1379 = vmatprep.subr.mxu0 0.0
  %1380 = vmatpush2.msra.mxu0 0.0
  %1381 = vmatprep.subr.mxu0 0.0
  %1382 = vmatpush2.msra.mxu0 0.0
  %1383 = vmatprep.subr.mxu0 0.0
  %1384 = vmatpush2.msra.mxu0 0.0
  %1385 = vmatprep.subr.mxu0 0.0
  %1386 = vmatpush2.msra.mxu0 0.0
  %1387 = vmatprep.subr.mxu0 0.0
  %1388 = vmatpush2.msra.mxu0 0.0
  %1389 = vmatprep.subr.mxu0 0.0
  %1390 = vmatpush2.msra.mxu0 0.0
  %1391 = vmatprep.subr.mxu0 0.0
  %1392 = vmatpush2.msra.mxu0 0.0
  %1393 = vmatprep.subr.mxu0 0.0
  %1394 = vmatpush2.msra.mxu0 0.0
  %1395 = vmatprep.subr.mxu0 0.0
  %1396 = vmatpush2.msra.mxu0 0.0
  %1397 = vmatprep.mubr.f32.mxu0 0.0
  %1398 = vmatmul.mubr.f32.gmra.mxu0 %v1325
  %v1399 = vpop.f32.mrf.mxu0
  %v1400 = vadd.f32 0.0, %v1399
  %v1401 = vpop.f32.mrf.mxu0
  %v1402 = vadd.f32 0.0, %v1401
  %1403 = vdwg.mxu0
  %1404 = vmatprep.subr.mxu0 %v438
  %1405 = vmatpush1.msra.mxu0 %v437
  %1406 = vmatprep.subr.mxu0 %v434
  %1407 = vmatpush1.msra.mxu0 %v433
  %1408 = vmatprep.subr.mxu0 %v430
  %1409 = vmatpush1.msra.mxu0 %v429
  %1410 = vmatprep.subr.mxu0 %v426
  %1411 = vmatpush1.msra.mxu0 %v425
  %1412 = vmatprep.subr.mxu0 %v422
  %1413 = vmatpush1.msra.mxu0 %v421
  %1414 = vmatprep.subr.mxu0 %v418
  %1415 = vmatpush1.msra.mxu0 %v417
  %1416 = vmatprep.subr.mxu0 %v414
  %1417 = vmatpush1.msra.mxu0 %v413
  %1418 = vmatprep.subr.mxu0 %v410
  %1419 = vmatpush1.msra.mxu0 %v409
  %1420 = vmatprep.subr.mxu0 %v406
  %1421 = vmatpush1.msra.mxu0 %v405
  %1422 = vmatprep.subr.mxu0 %v402
  %1423 = vmatpush1.msra.mxu0 %v401
  %1424 = vmatprep.subr.mxu0 %v398
  %1425 = vmatpush1.msra.mxu0 %v397
  %1426 = vmatprep.subr.mxu0 %v394
  %1427 = vmatpush1.msra.mxu0 %v393
  %1428 = vmatprep.subr.mxu0 %v390
  %1429 = vmatpush1.msra.mxu0 %v389
  %1430 = vmatprep.subr.mxu0 %v386
  %1431 = vmatpush1.msra.mxu0 %v385
  %1432 = vmatprep.subr.mxu0 %v382
  %1433 = vmatpush1.msra.mxu0 %v381
  %1434 = vmatprep.subr.mxu0 %v378
  %1435 = vmatpush1.msra.mxu0 %v377
  %1436 = vmatprep.subr.mxu0 0.0
  %1437 = vmatpush2.msra.mxu0 0.0
  %1438 = vmatprep.subr.mxu0 0.0
  %1439 = vmatpush2.msra.mxu0 0.0
  %1440 = vmatprep.subr.mxu0 0.0
  %1441 = vmatpush2.msra.mxu0 0.0
  %1442 = vmatprep.subr.mxu0 0.0
  %1443 = vmatpush2.msra.mxu0 0.0
  %1444 = vmatprep.subr.mxu0 0.0
  %1445 = vmatpush2.msra.mxu0 0.0
  %1446 = vmatprep.subr.mxu0 0.0
  %1447 = vmatpush2.msra.mxu0 0.0
  %1448 = vmatprep.subr.mxu0 0.0
  %1449 = vmatpush2.msra.mxu0 0.0
  %1450 = vmatprep.subr.mxu0 0.0
  %1451 = vmatpush2.msra.mxu0 0.0
  %1452 = vmatprep.subr.mxu0 0.0
  %1453 = vmatpush2.msra.mxu0 0.0
  %1454 = vmatprep.subr.mxu0 0.0
  %1455 = vmatpush2.msra.mxu0 0.0
  %1456 = vmatprep.subr.mxu0 0.0
  %1457 = vmatpush2.msra.mxu0 0.0
  %1458 = vmatprep.subr.mxu0 0.0
  %1459 = vmatpush2.msra.mxu0 0.0
  %1460 = vmatprep.subr.mxu0 0.0
  %1461 = vmatpush2.msra.mxu0 0.0
  %1462 = vmatprep.subr.mxu0 0.0
  %1463 = vmatpush2.msra.mxu0 0.0
  %1464 = vmatprep.subr.mxu0 0.0
  %1465 = vmatpush2.msra.mxu0 0.0
  %1466 = vmatprep.subr.mxu0 0.0
  %1467 = vmatpush2.msra.mxu0 0.0
  %1468 = vmatprep.mubr.f32.mxu0 0.0
  %1469 = vmatmul.mubr.f32.gmra.mxu0 %v1325
  %v1470 = vpop.f32.mrf.mxu0
  %v1471 = vadd.f32 0.0, %v1470
  %v1472 = vpop.f32.mrf.mxu0
  %v1473 = vadd.f32 0.0, %v1472
  %1474 = vdwg.mxu0
  %v1475 = vadd.f32 %v1329, %v1400
  %v1476 = vadd.f32 %v1330, %v1402
  %v1477 = vadd.f32 %v1331, %v1471
  %v1478 = vadd.f32 %v1332, %v1473
  %v1479 = vxor.u32 %v1475, 2147483648
  %v1480 = vmul.f32 %v1479, 1.442695
  %v1481 = vpow.pop %v1480
  %v1482 = vadd.f32 %v1481, 1.0
  %v1483 = vrcp.pop %v1482
  %v1484 = vmul.f32 1.0, %v1483
  %v1485 = vxor.u32 %v1476, 2147483648
  %v1486 = vmul.f32 %v1485, 1.442695
  %v1487 = vpow.pop %v1486
  %v1488 = vadd.f32 %v1487, 1.0
  %v1489 = vrcp.pop %v1488
  %v1490 = vmul.f32 1.0, %v1489
  %v1491 = vtanh.pop %v1477
  %v1492 = vxor.u32 %v1478, 2147483648
  %v1493 = vmul.f32 %v1492, 1.442695
  %v1494 = vpow.pop %v1493
  %v1495 = vadd.f32 %v1494, 1.0
  %v1496 = vrcp.pop %v1495
  %v1497 = vmul.f32 1.0, %v1496
  %v1498 = vmul.f32 %v1490, %v1323
  %v1499 = vmul.f32 %v1484, %v1491
  %v1500 = vadd.f32 %v1498, %v1499
  %v1501 = vtanh.pop %v1500
  %v1502 = vmul.f32 %v1497, %v1501
  %s1503 = smul.u32 6, 4
  %s1504 = smul.addr %s1503, 8
  %s1505 = scalar_lea.vmem [#allocation2], %s1504
  %v1506 = vld [vmem:[%s1505] sm:$0xff]
  %v1507 = vld [vmem:[%s1505 + $0x8] sm:$0xff]
  %v1508 = vld [vmem:[%s1505 + $0x10] sm:$0xff]
  %v1509 = vld [vmem:[%s1505 + $0x18] sm:$0xff]
  %1510 = vmatprep.subr.mxu0 %v436
  %1511 = vmatpush1.msra.mxu0 %v435
  %1512 = vmatprep.subr.mxu0 %v432
  %1513 = vmatpush1.msra.mxu0 %v431
  %1514 = vmatprep.subr.mxu0 %v428
  %1515 = vmatpush1.msra.mxu0 %v427
  %1516 = vmatprep.subr.mxu0 %v424
  %1517 = vmatpush1.msra.mxu0 %v423
  %1518 = vmatprep.subr.mxu0 %v420
  %1519 = vmatpush1.msra.mxu0 %v419
  %1520 = vmatprep.subr.mxu0 %v416
  %1521 = vmatpush1.msra.mxu0 %v415
  %1522 = vmatprep.subr.mxu0 %v412
  %1523 = vmatpush1.msra.mxu0 %v411
  %1524 = vmatprep.subr.mxu0 %v408
  %1525 = vmatpush1.msra.mxu0 %v407
  %1526 = vmatprep.subr.mxu0 %v404
  %1527 = vmatpush1.msra.mxu0 %v403
  %1528 = vmatprep.subr.mxu0 %v400
  %1529 = vmatpush1.msra.mxu0 %v399
  %1530 = vmatprep.subr.mxu0 %v396
  %1531 = vmatpush1.msra.mxu0 %v395
  %1532 = vmatprep.subr.mxu0 %v392
  %1533 = vmatpush1.msra.mxu0 %v391
  %1534 = vmatprep.subr.mxu0 %v388
  %1535 = vmatpush1.msra.mxu0 %v387
  %1536 = vmatprep.subr.mxu0 %v384
  %1537 = vmatpush1.msra.mxu0 %v383
  %1538 = vmatprep.subr.mxu0 %v380
  %1539 = vmatpush1.msra.mxu0 %v379
  %1540 = vmatprep.subr.mxu0 %v376
  %1541 = vmatpush1.msra.mxu0 %v375
  %1542 = vmatprep.subr.mxu0 0.0
  %1543 = vmatpush2.msra.mxu0 0.0
  %1544 = vmatprep.subr.mxu0 0.0
  %1545 = vmatpush2.msra.mxu0 0.0
  %1546 = vmatprep.subr.mxu0 0.0
  %1547 = vmatpush2.msra.mxu0 0.0
  %1548 = vmatprep.subr.mxu0 0.0
  %1549 = vmatpush2.msra.mxu0 0.0
  %1550 = vmatprep.subr.mxu0 0.0
  %1551 = vmatpush2.msra.mxu0 0.0
  %1552 = vmatprep.subr.mxu0 0.0
  %1553 = vmatpush2.msra.mxu0 0.0
  %1554 = vmatprep.subr.mxu0 0.0
  %1555 = vmatpush2.msra.mxu0 0.0
  %1556 = vmatprep.subr.mxu0 0.0
  %1557 = vmatpush2.msra.mxu0 0.0
  %1558 = vmatprep.subr.mxu0 0.0
  %1559 = vmatpush2.msra.mxu0 0.0
  %1560 = vmatprep.subr.mxu0 0.0
  %1561 = vmatpush2.msra.mxu0 0.0
  %1562 = vmatprep.subr.mxu0 0.0
  %1563 = vmatpush2.msra.mxu0 0.0
  %1564 = vmatprep.subr.mxu0 0.0
  %1565 = vmatpush2.msra.mxu0 0.0
  %1566 = vmatprep.subr.mxu0 0.0
  %1567 = vmatpush2.msra.mxu0 0.0
  %1568 = vmatprep.subr.mxu0 0.0
  %1569 = vmatpush2.msra.mxu0 0.0
  %1570 = vmatprep.subr.mxu0 0.0
  %1571 = vmatpush2.msra.mxu0 0.0
  %1572 = vmatprep.subr.mxu0 0.0
  %1573 = vmatpush2.msra.mxu0 0.0
  %1574 = vmatprep.mubr.f32.mxu0 0.0
  %1575 = vmatmul.mubr.f32.gmra.mxu0 %v1502
  %v1576 = vpop.f32.mrf.mxu0
  %v1577 = vadd.f32 0.0, %v1576
  %v1578 = vpop.f32.mrf.mxu0
  %v1579 = vadd.f32 0.0, %v1578
  %1580 = vdwg.mxu0
  %1581 = vmatprep.subr.mxu0 %v438
  %1582 = vmatpush1.msra.mxu0 %v437
  %1583 = vmatprep.subr.mxu0 %v434
  %1584 = vmatpush1.msra.mxu0 %v433
  %1585 = vmatprep.subr.mxu0 %v430
  %1586 = vmatpush1.msra.mxu0 %v429
  %1587 = vmatprep.subr.mxu0 %v426
  %1588 = vmatpush1.msra.mxu0 %v425
  %1589 = vmatprep.subr.mxu0 %v422
  %1590 = vmatpush1.msra.mxu0 %v421
  %1591 = vmatprep.subr.mxu0 %v418
  %1592 = vmatpush1.msra.mxu0 %v417
  %1593 = vmatprep.subr.mxu0 %v414
  %1594 = vmatpush1.msra.mxu0 %v413
  %1595 = vmatprep.subr.mxu0 %v410
  %1596 = vmatpush1.msra.mxu0 %v409
  %1597 = vmatprep.subr.mxu0 %v406
  %1598 = vmatpush1.msra.mxu0 %v405
  %1599 = vmatprep.subr.mxu0 %v402
  %1600 = vmatpush1.msra.mxu0 %v401
  %1601 = vmatprep.subr.mxu0 %v398
  %1602 = vmatpush1.msra.mxu0 %v397
  %1603 = vmatprep.subr.mxu0 %v394
  %1604 = vmatpush1.msra.mxu0 %v393
  %1605 = vmatprep.subr.mxu0 %v390
  %1606 = vmatpush1.msra.mxu0 %v389
  %1607 = vmatprep.subr.mxu0 %v386
  %1608 = vmatpush1.msra.mxu0 %v385
  %1609 = vmatprep.subr.mxu0 %v382
  %1610 = vmatpush1.msra.mxu0 %v381
  %1611 = vmatprep.subr.mxu0 %v378
  %1612 = vmatpush1.msra.mxu0 %v377
  %1613 = vmatprep.subr.mxu0 0.0
  %1614 = vmatpush2.msra.mxu0 0.0
  %1615 = vmatprep.subr.mxu0 0.0
  %1616 = vmatpush2.msra.mxu0 0.0
  %1617 = vmatprep.subr.mxu0 0.0
  %1618 = vmatpush2.msra.mxu0 0.0
  %1619 = vmatprep.subr.mxu0 0.0
  %1620 = vmatpush2.msra.mxu0 0.0
  %1621 = vmatprep.subr.mxu0 0.0
  %1622 = vmatpush2.msra.mxu0 0.0
  %1623 = vmatprep.subr.mxu0 0.0
  %1624 = vmatpush2.msra.mxu0 0.0
  %1625 = vmatprep.subr.mxu0 0.0
  %1626 = vmatpush2.msra.mxu0 0.0
  %1627 = vmatprep.subr.mxu0 0.0
  %1628 = vmatpush2.msra.mxu0 0.0
  %1629 = vmatprep.subr.mxu0 0.0
  %1630 = vmatpush2.msra.mxu0 0.0
  %1631 = vmatprep.subr.mxu0 0.0
  %1632 = vmatpush2.msra.mxu0 0.0
  %1633 = vmatprep.subr.mxu0 0.0
  %1634 = vmatpush2.msra.mxu0 0.0
  %1635 = vmatprep.subr.mxu0 0.0
  %1636 = vmatpush2.msra.mxu0 0.0
  %1637 = vmatprep.subr.mxu0 0.0
  %1638 = vmatpush2.msra.mxu0 0.0
  %1639 = vmatprep.subr.mxu0 0.0
  %1640 = vmatpush2.msra.mxu0 0.0
  %1641 = vmatprep.subr.mxu0 0.0
  %1642 = vmatpush2.msra.mxu0 0.0
  %1643 = vmatprep.subr.mxu0 0.0
  %1644 = vmatpush2.msra.mxu0 0.0
  %1645 = vmatprep.mubr.f32.mxu0 0.0
  %1646 = vmatmul.mubr.f32.gmra.mxu0 %v1502
  %v1647 = vpop.f32.mrf.mxu0
  %v1648 = vadd.f32 0.0, %v1647
  %v1649 = vpop.f32.mrf.mxu0
  %v1650 = vadd.f32 0.0, %v1649
  %1651 = vdwg.mxu0
  %v1652 = vadd.f32 %v1506, %v1577
  %v1653 = vadd.f32 %v1507, %v1579
  %v1654 = vadd.f32 %v1508, %v1648
  %v1655 = vadd.f32 %v1509, %v1650
  %v1656 = vxor.u32 %v1652, 2147483648
  %v1657 = vmul.f32 %v1656, 1.442695
  %v1658 = vpow.pop %v1657
  %v1659 = vadd.f32 %v1658, 1.0
  %v1660 = vrcp.pop %v1659
  %v1661 = vmul.f32 1.0, %v1660
  %v1662 = vxor.u32 %v1653, 2147483648
  %v1663 = vmul.f32 %v1662, 1.442695
  %v1664 = vpow.pop %v1663
  %v1665 = vadd.f32 %v1664, 1.0
  %v1666 = vrcp.pop %v1665
  %v1667 = vmul.f32 1.0, %v1666
  %v1668 = vtanh.pop %v1654
  %v1669 = vxor.u32 %v1655, 2147483648
  %v1670 = vmul.f32 %v1669, 1.442695
  %v1671 = vpow.pop %v1670
  %v1672 = vadd.f32 %v1671, 1.0
  %v1673 = vrcp.pop %v1672
  %v1674 = vmul.f32 1.0, %v1673
  %v1675 = vmul.f32 %v1667, %v1500
  %v1676 = vmul.f32 %v1661, %v1668
  %v1677 = vadd.f32 %v1675, %v1676
  %v1678 = vtanh.pop %v1677
  %v1679 = vmul.f32 %v1674, %v1678
  %s1680 = smul.u32 7, 4
  %s1681 = smul.addr %s1680, 8
  %s1682 = scalar_lea.vmem [#allocation2], %s1681
  %v1683 = vld [vmem:[%s1682] sm:$0xff]
  %v1684 = vld [vmem:[%s1682 + $0x8] sm:$0xff]
  %v1685 = vld [vmem:[%s1682 + $0x10] sm:$0xff]
  %v1686 = vld [vmem:[%s1682 + $0x18] sm:$0xff]
  %1687 = vmatprep.subr.mxu0 %v436
  %1688 = vmatpush1.msra.mxu0 %v435
  %1689 = vmatprep.subr.mxu0 %v432
  %1690 = vmatpush1.msra.mxu0 %v431
  %1691 = vmatprep.subr.mxu0 %v428
  %1692 = vmatpush1.msra.mxu0 %v427
  %1693 = vmatprep.subr.mxu0 %v424
  %1694 = vmatpush1.msra.mxu0 %v423
  %1695 = vmatprep.subr.mxu0 %v420
  %1696 = vmatpush1.msra.mxu0 %v419
  %1697 = vmatprep.subr.mxu0 %v416
  %1698 = vmatpush1.msra.mxu0 %v415
  %1699 = vmatprep.subr.mxu0 %v412
  %1700 = vmatpush1.msra.mxu0 %v411
  %1701 = vmatprep.subr.mxu0 %v408
  %1702 = vmatpush1.msra.mxu0 %v407
  %1703 = vmatprep.subr.mxu0 %v404
  %1704 = vmatpush1.msra.mxu0 %v403
  %1705 = vmatprep.subr.mxu0 %v400
  %1706 = vmatpush1.msra.mxu0 %v399
  %1707 = vmatprep.subr.mxu0 %v396
  %1708 = vmatpush1.msra.mxu0 %v395
  %1709 = vmatprep.subr.mxu0 %v392
  %1710 = vmatpush1.msra.mxu0 %v391
  %1711 = vmatprep.subr.mxu0 %v388
  %1712 = vmatpush1.msra.mxu0 %v387
  %1713 = vmatprep.subr.mxu0 %v384
  %1714 = vmatpush1.msra.mxu0 %v383
  %1715 = vmatprep.subr.mxu0 %v380
  %1716 = vmatpush1.msra.mxu0 %v379
  %1717 = vmatprep.subr.mxu0 %v376
  %1718 = vmatpush1.msra.mxu0 %v375
  %1719 = vmatprep.subr.mxu0 0.0
  %1720 = vmatpush2.msra.mxu0 0.0
  %1721 = vmatprep.subr.mxu0 0.0
  %1722 = vmatpush2.msra.mxu0 0.0
  %1723 = vmatprep.subr.mxu0 0.0
  %1724 = vmatpush2.msra.mxu0 0.0
  %1725 = vmatprep.subr.mxu0 0.0
  %1726 = vmatpush2.msra.mxu0 0.0
  %1727 = vmatprep.subr.mxu0 0.0
  %1728 = vmatpush2.msra.mxu0 0.0
  %1729 = vmatprep.subr.mxu0 0.0
  %1730 = vmatpush2.msra.mxu0 0.0
  %1731 = vmatprep.subr.mxu0 0.0
  %1732 = vmatpush2.msra.mxu0 0.0
  %1733 = vmatprep.subr.mxu0 0.0
  %1734 = vmatpush2.msra.mxu0 0.0
  %1735 = vmatprep.subr.mxu0 0.0
  %1736 = vmatpush2.msra.mxu0 0.0
  %1737 = vmatprep.subr.mxu0 0.0
  %1738 = vmatpush2.msra.mxu0 0.0
  %1739 = vmatprep.subr.mxu0 0.0
  %1740 = vmatpush2.msra.mxu0 0.0
  %1741 = vmatprep.subr.mxu0 0.0
  %1742 = vmatpush2.msra.mxu0 0.0
  %1743 = vmatprep.subr.mxu0 0.0
  %1744 = vmatpush2.msra.mxu0 0.0
  %1745 = vmatprep.subr.mxu0 0.0
  %1746 = vmatpush2.msra.mxu0 0.0
  %1747 = vmatprep.subr.mxu0 0.0
  %1748 = vmatpush2.msra.mxu0 0.0
  %1749 = vmatprep.subr.mxu0 0.0
  %1750 = vmatpush2.msra.mxu0 0.0
  %1751 = vmatprep.mubr.f32.mxu0 0.0
  %1752 = vmatmul.mubr.f32.gmra.mxu0 %v1679
  %v1753 = vpop.f32.mrf.mxu0
  %v1754 = vadd.f32 0.0, %v1753
  %v1755 = vpop.f32.mrf.mxu0
  %v1756 = vadd.f32 0.0, %v1755
  %1757 = vdwg.mxu0
  %1758 = vmatprep.subr.mxu0 %v438
  %1759 = vmatpush1.msra.mxu0 %v437
  %1760 = vmatprep.subr.mxu0 %v434
  %1761 = vmatpush1.msra.mxu0 %v433
  %1762 = vmatprep.subr.mxu0 %v430
  %1763 = vmatpush1.msra.mxu0 %v429
  %1764 = vmatprep.subr.mxu0 %v426
  %1765 = vmatpush1.msra.mxu0 %v425
  %1766 = vmatprep.subr.mxu0 %v422
  %1767 = vmatpush1.msra.mxu0 %v421
  %1768 = vmatprep.subr.mxu0 %v418
  %1769 = vmatpush1.msra.mxu0 %v417
  %1770 = vmatprep.subr.mxu0 %v414
  %1771 = vmatpush1.msra.mxu0 %v413
  %1772 = vmatprep.subr.mxu0 %v410
  %1773 = vmatpush1.msra.mxu0 %v409
  %1774 = vmatprep.subr.mxu0 %v406
  %1775 = vmatpush1.msra.mxu0 %v405
  %1776 = vmatprep.subr.mxu0 %v402
  %1777 = vmatpush1.msra.mxu0 %v401
  %1778 = vmatprep.subr.mxu0 %v398
  %1779 = vmatpush1.msra.mxu0 %v397
  %1780 = vmatprep.subr.mxu0 %v394
  %1781 = vmatpush1.msra.mxu0 %v393
  %1782 = vmatprep.subr.mxu0 %v390
  %1783 = vmatpush1.msra.mxu0 %v389
  %1784 = vmatprep.subr.mxu0 %v386
  %1785 = vmatpush1.msra.mxu0 %v385
  %1786 = vmatprep.subr.mxu0 %v382
  %1787 = vmatpush1.msra.mxu0 %v381
  %1788 = vmatprep.subr.mxu0 %v378
  %1789 = vmatpush1.msra.mxu0 %v377
  %1790 = vmatprep.subr.mxu0 0.0
  %1791 = vmatpush2.msra.mxu0 0.0
  %1792 = vmatprep.subr.mxu0 0.0
  %1793 = vmatpush2.msra.mxu0 0.0
  %1794 = vmatprep.subr.mxu0 0.0
  %1795 = vmatpush2.msra.mxu0 0.0
  %1796 = vmatprep.subr.mxu0 0.0
  %1797 = vmatpush2.msra.mxu0 0.0
  %1798 = vmatprep.subr.mxu0 0.0
  %1799 = vmatpush2.msra.mxu0 0.0
  %1800 = vmatprep.subr.mxu0 0.0
  %1801 = vmatpush2.msra.mxu0 0.0
  %1802 = vmatprep.subr.mxu0 0.0
  %1803 = vmatpush2.msra.mxu0 0.0
  %1804 = vmatprep.subr.mxu0 0.0
  %1805 = vmatpush2.msra.mxu0 0.0
  %1806 = vmatprep.subr.mxu0 0.0
  %1807 = vmatpush2.msra.mxu0 0.0
  %1808 = vmatprep.subr.mxu0 0.0
  %1809 = vmatpush2.msra.mxu0 0.0
  %1810 = vmatprep.subr.mxu0 0.0
  %1811 = vmatpush2.msra.mxu0 0.0
  %1812 = vmatprep.subr.mxu0 0.0
  %1813 = vmatpush2.msra.mxu0 0.0
  %1814 = vmatprep.subr.mxu0 0.0
  %1815 = vmatpush2.msra.mxu0 0.0
  %1816 = vmatprep.subr.mxu0 0.0
  %1817 = vmatpush2.msra.mxu0 0.0
  %1818 = vmatprep.subr.mxu0 0.0
  %1819 = vmatpush2.msra.mxu0 0.0
  %1820 = vmatprep.subr.mxu0 0.0
  %1821 = vmatpush2.msra.mxu0 0.0
  %1822 = vmatprep.mubr.f32.mxu0 0.0
  %1823 = vmatmul.mubr.f32.gmra.mxu0 %v1679
  %v1824 = vpop.f32.mrf.mxu0
  %v1825 = vadd.f32 0.0, %v1824
  %v1826 = vpop.f32.mrf.mxu0
  %v1827 = vadd.f32 0.0, %v1826
  %1828 = vdwg.mxu0
  %v1829 = vadd.f32 %v1683, %v1754
  %v1830 = vadd.f32 %v1684, %v1756
  %v1831 = vadd.f32 %v1685, %v1825
  %v1832 = vadd.f32 %v1686, %v1827
  %v1833 = vxor.u32 %v1829, 2147483648
  %v1834 = vmul.f32 %v1833, 1.442695
  %v1835 = vpow.pop %v1834
  %v1836 = vadd.f32 %v1835, 1.0
  %v1837 = vrcp.pop %v1836
  %v1838 = vmul.f32 1.0, %v1837
  %v1839 = vxor.u32 %v1830, 2147483648
  %v1840 = vmul.f32 %v1839, 1.442695
  %v1841 = vpow.pop %v1840
  %v1842 = vadd.f32 %v1841, 1.0
  %v1843 = vrcp.pop %v1842
  %v1844 = vmul.f32 1.0, %v1843
  %v1845 = vtanh.pop %v1831
  %v1846 = vxor.u32 %v1832, 2147483648
  %v1847 = vmul.f32 %v1846, 1.442695
  %v1848 = vpow.pop %v1847
  %v1849 = vadd.f32 %v1848, 1.0
  %v1850 = vrcp.pop %v1849
  %v1851 = vmul.f32 1.0, %v1850
  %v1852 = vmul.f32 %v1844, %v1677
  %v1853 = vmul.f32 %v1838, %v1845
  %v1854 = vadd.f32 %v1852, %v1853
  %v1855 = vtanh.pop %v1854
  %v1856 = vmul.f32 %v1851, %v1855
  %1857 = vst [vmem:[#allocation3] sm:$0xff] %v1856
  %1858 = vst [vmem:[#allocation4] sm:$0xff] %v1854
  // Predicated region
  $region22: #{text_generation_forward.2} parent=0 // pred_check
    %p1859 = pneg %p17
  $region23: #{text_generation_forward.2} parent=0 // pred_check_branch
    %1861 = sbr.rel (%p1859) target = $region25
  $region24: #{text_generation_forward.2} parent=0 // pred_region
    %1862 = vst [vmem:[%s4] sm:$0xff] %v1856
  $region25: #{text_generation_forward.2} parent=0 // pred_fallthru
    _
  // Predicated region
  $region26: #{text_generation_forward.2} parent=0 // pred_check
    _
  $region27: #{text_generation_forward.2} parent=0 // pred_check_branch
    %1864 = sbr.rel (0) target = $region29
  $region28: #{text_generation_forward.2} parent=0 // pred_region
    _
  $region29: #{text_generation_forward.2} parent=0 // pred_fallthru
    _
  // Predicated region
  $region30: #{text_generation_forward.2} parent=0 // pred_check
    _
  $region31: #{text_generation_forward.2} parent=0 // pred_check_branch
    %1866 = sbr.rel (0) target = $region33
  $region32: #{text_generation_forward.2} parent=0 // pred_region
    _
  $region33: #{text_generation_forward.2} parent=0 // pred_fallthru
    _

</llo_original>
